<compile_context>
chip_gen: v7x
topology: tpu7x:2x2x1
jax: 0.10.0
libtpu: 0.0.40
codegen_flags: <defaults>
</compile_context>

<pallas_src>
import math

import jax
import jax.numpy as jnp
from jax.experimental import pallas as pl
from jax.experimental.pallas import tpu as pltpu


def _round_up(x, m):
    return ((x + m - 1) // m) * m


def pinet_kernel(x_ref, w1_ref, b1_ref, w2_ref, b2_ref, w3_ref, b3_ref, o_ref):
    # x_ref: (bm, nS)    w1: (nS, H)  b1: (1, H)
    # w2:   (H, H)       b2: (1, H)
    # w3:   (H, nA)      b3: (1, nA)
    # o_ref: (bm, nA)  -- softmax probabilities
    x = x_ref[...]
    h = jnp.dot(x, w1_ref[...], preferred_element_type=jnp.float32) + b1_ref[...]
    h = jnp.maximum(h, 0.0)
    h = jnp.dot(h, w2_ref[...], preferred_element_type=jnp.float32) + b2_ref[...]
    h = jnp.maximum(h, 0.0)
    logits = jnp.dot(h, w3_ref[...], preferred_element_type=jnp.float32) + b3_ref[...]
    logits = logits * 0.1  # "/ 10" in the PyTorch module
    # Numerically stable softmax over the action dimension (matches
    # torch.nn.functional.softmax / jax.nn.softmax).
    m = jnp.max(logits, axis=-1, keepdims=True)
    e = jnp.exp(logits - m)
    y = e / jnp.sum(e, axis=-1, keepdims=True)
    o_ref[...] = y.astype(o_ref.dtype)


def pinet_forward(obs, params, *, bm=256):
    """obs: [B, nS] (flat Box observation) -> action probabilities [B, nA]."""
    w1, b1, w2, b2, w3, b3 = params
    x = jnp.asarray(obs, jnp.float32)
    if x.ndim == 1:  # single-observation path of PiNet.forward
        x = x[None, :]
    B, nS = x.shape
    H = w1.shape[1]
    nA = w3.shape[1]

    # Pick an effective batch tile (multiple of 8) and pad B up to a multiple
    # of it, so arbitrary batch sizes work and small batches don't over-tile.
    bm_eff = min(bm, _round_up(B, 8))
    B_pad = _round_up(B, bm_eff)
    if B_pad != B:
        x = jnp.pad(x, ((0, B_pad - B), (0, 0)))

    grid = (B_pad // bm_eff,)
    full = lambda shape: pl.BlockSpec(shape, lambda i: (0, 0))  # VMEM-resident

    flops = 2 * B_pad * (nS * H + H * H + H * nA) + 6 * B_pad * (2 * H + nA)
    bytes_accessed = 4 * (
        B_pad * nS + B_pad * nA + nS * H + H * H + H * nA + 2 * H + nA
    )

    out = pl.pallas_call(
        pinet_kernel,
        out_shape=jax.ShapeDtypeStruct((B_pad, nA), jnp.float32),
        grid=grid,
        in_specs=[
            pl.BlockSpec((bm_eff, nS), lambda i: (i, 0)),  # x, streamed over batch
            full((nS, H)),                                 # w1 (replicated)
            full((1, H)),                                  # b1
            full((H, H)),                                  # w2
            full((1, H)),                                  # b2
            full((H, nA)),                                 # w3
            full((1, nA)),                                 # b3
        ],
        # nA is small (<128) so this is a masked store, but it is amortized
        # over bm_eff rows per grid step and the output is tiny.
        out_specs=pl.BlockSpec((bm_eff, nA), lambda i: (i, 0)),
        compiler_params=pltpu.CompilerParams(
            dimension_semantics=("parallel",)),
        cost_estimate=pl.CostEstimate(
            flops=flops,
            transcendentals=B_pad * nA,
            bytes_accessed=bytes_accessed,
        ),
    )(x, w1, b1, w2, b2, w3, b3)

    return out[:B]


def init_linear(key, fan_in, fan_out):
    """Deterministic PyTorch-style nn.Linear init: U(-1/sqrt(fan_in), 1/sqrt(fan_in)).
    Weight returned as [in, out] (transposed vs. PyTorch)."""
    kw, kb = jax.random.split(key)
    bound = 1.0 / math.sqrt(fan_in)
    w = jax.random.uniform(kw, (fan_in, fan_out), jnp.float32, -bound, bound)
    b = jax.random.uniform(kb, (1, fan_out), jnp.float32, -bound, bound)
    return w, b


if __name__ == "__main__":
    # Small synthetic env: flat Box obs with nS = 16 dims, nA = 4 discrete
    # actions, hidden_dim = 256 (PiNet default). preprocess_obs with
    # NORMALIZE_IMG=False on a flat Box obs is just a float cast, so no extra
    # preprocessing op is needed.
    # TODO(synk): the image-space CNN branch of PiNet is not implemented here.
    B, nS, nA, H = 512, 16, 4, 256  # B=512 with bm=256 -> 2 parallel grid steps

    key = jax.random.PRNGKey(0)
    k_obs, k1, k2, k3 = jax.random.split(key, 4)

    obs = jax.random.normal(k_obs, (B, nS), jnp.float32)

    w1, b1 = init_linear(k1, nS, H)
    w2, b2 = init_linear(k2, H, H)
    w3, b3 = init_linear(k3, H, nA)
    params = (w1, b1, w2, b2, w3, b3)

    y = pinet_forward(obs, params)
    y = jax.block_until_ready(y)

    # Pure-JAX reference check.
    h = jnp.maximum(obs @ w1 + b1, 0.0)
    h = jnp.maximum(h @ w2 + b2, 0.0)
    ref = jax.nn.softmax((h @ w3 + b3) / 10.0, axis=-1)

    assert y.shape == (B, nA)
    assert bool(jnp.all(y >= 0)), "probabilities must be non-negative"
    assert jnp.allclose(jnp.sum(y, axis=-1), 1.0, atol=1e-5)
    assert jnp.allclose(y, ref, atol=1e-5, rtol=1e-5)

    print("KERNEL_OK")
</pallas_src>

<mosaic_0001>
module attributes {stable_mosaic.version = 11 : i64} {
  func.func @pinet_kernel(%arg0: i32, %arg1: memref<256x16xf32, #tpu.memory_space<vmem>>, %arg2: memref<16x256xf32, #tpu.memory_space<vmem>>, %arg3: memref<1x256xf32, #tpu.memory_space<vmem>>, %arg4: memref<256x256xf32, #tpu.memory_space<vmem>>, %arg5: memref<1x256xf32, #tpu.memory_space<vmem>>, %arg6: memref<256x4xf32, #tpu.memory_space<vmem>>, %arg7: memref<1x4xf32, #tpu.memory_space<vmem>>, %arg8: memref<256x4xf32, #tpu.memory_space<vmem>>) attributes {dimension_semantics = [#tpu.dimension_semantics<parallel>], iteration_bounds = array<i64: 2>, scalar_prefetch = 0 : i64, scratch_operands = 0 : i64, tpu.core_type = #tpu.core_type<tc>, window_params = [{transform_indices = @transform_0, window_bounds = array<i64: 256, 16>}, {pipeline_mode = #tpu.pipeline_mode<synchronous>, transform_indices = @transform_1, window_bounds = array<i64: 16, 256>}, {pipeline_mode = #tpu.pipeline_mode<synchronous>, transform_indices = @transform_2, window_bounds = array<i64: 1, 256>}, {pipeline_mode = #tpu.pipeline_mode<synchronous>, transform_indices = @transform_3, window_bounds = array<i64: 256, 256>}, {pipeline_mode = #tpu.pipeline_mode<synchronous>, transform_indices = @transform_4, window_bounds = array<i64: 1, 256>}, {pipeline_mode = #tpu.pipeline_mode<synchronous>, transform_indices = @transform_5, window_bounds = array<i64: 256, 4>}, {pipeline_mode = #tpu.pipeline_mode<synchronous>, transform_indices = @transform_6, window_bounds = array<i64: 1, 4>}, {transform_indices = @transform_7, window_bounds = array<i64: 256, 4>}]} {
    %c0 = arith.constant 0 : index
    %c0_0 = arith.constant 0 : index
    %0 = vector.load %arg1[%c0, %c0_0] : memref<256x16xf32, #tpu.memory_space<vmem>>, vector<256x16xf32>
    %c0_1 = arith.constant 0 : index
    %c0_2 = arith.constant 0 : index
    %1 = vector.load %arg2[%c0_1, %c0_2] : memref<16x256xf32, #tpu.memory_space<vmem>>, vector<16x256xf32>
    %cst = arith.constant dense<0.000000e+00> : vector<256x256xf32>
    %2 = tpu.matmul %0, %1, %cst {dimension_numbers = #tpu.dot_dimension_numbers<[1], [0], [0], [1], [0, 0, 1, 1], [], []>} : vector<256x16xf32>, vector<16x256xf32>, vector<256x256xf32> -> vector<256x256xf32>
    %c0_3 = arith.constant 0 : index
    %c0_4 = arith.constant 0 : index
    %3 = vector.load %arg3[%c0_3, %c0_4] : memref<1x256xf32, #tpu.memory_space<vmem>>, vector<1x256xf32>
    %4 = vector.broadcast %3 : vector<1x256xf32> to vector<256x256xf32>
    %5 = arith.addf %2, %4 : vector<256x256xf32>
    %cst_5 = arith.constant 0.000000e+00 : f32
    %6 = vector.broadcast %cst_5 : f32 to vector<256x256xf32>
    %7 = arith.maximumf %5, %6 : vector<256x256xf32>
    %c0_6 = arith.constant 0 : index
    %c0_7 = arith.constant 0 : index
    %8 = vector.load %arg4[%c0_6, %c0_7] : memref<256x256xf32, #tpu.memory_space<vmem>>, vector<256x256xf32>
    %cst_8 = arith.constant dense<0.000000e+00> : vector<256x256xf32>
    %9 = tpu.matmul %7, %8, %cst_8 {dimension_numbers = #tpu.dot_dimension_numbers<[1], [0], [0], [1], [0, 0, 1, 1], [], []>} : vector<256x256xf32>, vector<256x256xf32>, vector<256x256xf32> -> vector<256x256xf32>
    %c0_9 = arith.constant 0 : index
    %c0_10 = arith.constant 0 : index
    %10 = vector.load %arg5[%c0_9, %c0_10] : memref<1x256xf32, #tpu.memory_space<vmem>>, vector<1x256xf32>
    %11 = vector.broadcast %10 : vector<1x256xf32> to vector<256x256xf32>
    %12 = arith.addf %9, %11 : vector<256x256xf32>
    %cst_11 = arith.constant 0.000000e+00 : f32
    %13 = vector.broadcast %cst_11 : f32 to vector<256x256xf32>
    %14 = arith.maximumf %12, %13 : vector<256x256xf32>
    %c0_12 = arith.constant 0 : index
    %c0_13 = arith.constant 0 : index
    %15 = vector.load %arg6[%c0_12, %c0_13] : memref<256x4xf32, #tpu.memory_space<vmem>>, vector<256x4xf32>
    %cst_14 = arith.constant dense<0.000000e+00> : vector<256x4xf32>
    %16 = tpu.matmul %14, %15, %cst_14 {dimension_numbers = #tpu.dot_dimension_numbers<[1], [0], [0], [1], [0, 0, 1, 1], [], []>} : vector<256x256xf32>, vector<256x4xf32>, vector<256x4xf32> -> vector<256x4xf32>
    %c0_15 = arith.constant 0 : index
    %c0_16 = arith.constant 0 : index
    %17 = vector.load %arg7[%c0_15, %c0_16] : memref<1x4xf32, #tpu.memory_space<vmem>>, vector<1x4xf32>
    %18 = vector.broadcast %17 : vector<1x4xf32> to vector<256x4xf32>
    %19 = arith.addf %16, %18 : vector<256x4xf32>
    %cst_17 = arith.constant 1.000000e-01 : f32
    %20 = vector.broadcast %cst_17 : f32 to vector<256x4xf32>
    %21 = arith.mulf %19, %20 : vector<256x4xf32>
    %cst_18 = arith.constant dense<0xFF800000> : vector<256xf32>
    %22 = vector.multi_reduction <maximumf>, %21, %cst_18 [1] : vector<256x4xf32> to vector<256xf32>
    %23 = vector.shape_cast %22 : vector<256xf32> to vector<256x1xf32>
    %24 = vector.broadcast %23 : vector<256x1xf32> to vector<256x4xf32>
    %25 = arith.subf %21, %24 : vector<256x4xf32>
    %26 = math.exp %25 : vector<256x4xf32>
    %cst_19 = arith.constant dense<0.000000e+00> : vector<256xf32>
    %27 = vector.multi_reduction <add>, %26, %cst_19 [1] : vector<256x4xf32> to vector<256xf32>
    %28 = vector.shape_cast %27 : vector<256xf32> to vector<256x1xf32>
    %29 = vector.broadcast %28 : vector<256x1xf32> to vector<256x4xf32>
    %30 = arith.divf %26, %29 : vector<256x4xf32>
    %c0_20 = arith.constant 0 : index
    %c0_21 = arith.constant 0 : index
    %31 = vector.load %arg8[%c0_20, %c0_21] : memref<256x4xf32, #tpu.memory_space<vmem>>, vector<256x4xf32>
    tpu.vector_store %arg8[%c0_20, %c0_21], %30 {strides = array<i32>} : memref<256x4xf32, #tpu.memory_space<vmem>>, vector<256x4xf32>,
    return
  }
  func.func @transform_0(%arg0: i32) -> (i32, i32) {
    %c0_i32 = arith.constant 0 : i32
    %c0_i32_0 = arith.constant 0 : i32
    return %arg0, %c0_i32 : i32, i32
  }
  func.func @transform_1(%arg0: i32) -> (i32, i32) {
    %c0_i32 = arith.constant 0 : i32
    %c0_i32_0 = arith.constant 0 : i32
    %c0_i32_1 = arith.constant 0 : i32
    return %c0_i32, %c0_i32_0 : i32, i32
  }
  func.func @transform_2(%arg0: i32) -> (i32, i32) {
    %c0_i32 = arith.constant 0 : i32
    %c0_i32_0 = arith.constant 0 : i32
    %c0_i32_1 = arith.constant 0 : i32
    return %c0_i32, %c0_i32_0 : i32, i32
  }
  func.func @transform_3(%arg0: i32) -> (i32, i32) {
    %c0_i32 = arith.constant 0 : i32
    %c0_i32_0 = arith.constant 0 : i32
    %c0_i32_1 = arith.constant 0 : i32
    return %c0_i32, %c0_i32_0 : i32, i32
  }
  func.func @transform_4(%arg0: i32) -> (i32, i32) {
    %c0_i32 = arith.constant 0 : i32
    %c0_i32_0 = arith.constant 0 : i32
    %c0_i32_1 = arith.constant 0 : i32
    return %c0_i32, %c0_i32_0 : i32, i32
  }
  func.func @transform_5(%arg0: i32) -> (i32, i32) {
    %c0_i32 = arith.constant 0 : i32
    %c0_i32_0 = arith.constant 0 : i32
    %c0_i32_1 = arith.constant 0 : i32
    return %c0_i32, %c0_i32_0 : i32, i32
  }
  func.func @transform_6(%arg0: i32) -> (i32, i32) {
    %c0_i32 = arith.constant 0 : i32
    %c0_i32_0 = arith.constant 0 : i32
    %c0_i32_1 = arith.constant 0 : i32
    return %c0_i32, %c0_i32_0 : i32, i32
  }
  func.func @transform_7(%arg0: i32) -> (i32, i32) {
    %c0_i32 = arith.constant 0 : i32
    %c0_i32_0 = arith.constant 0 : i32
    return %arg0, %c0_i32 : i32, i32
  }
}

</mosaic_0001>

<llo_original>
// kernel: tpu_custom_call.1
$region0: #{tpu_custom_call.1}
  #allocation0 [shape = 'u32[]', space=smem, size = 0x4, offset = 0x4, fixed_abs, tag = 'smem constant byte address 0x4 - core index']
  #allocation1 [shape = 'u32[144,128]{1,0:T(1,128)}', space=vmem, size = 0x12000, scoped, tag = 'internal scratch']
  %s0 = inlined_call_operand.vmem [shape: f32[512,16], index: 0, kind: input, shape index: {}]
  %s1 = inlined_call_operand.vmem [shape: f32[16,256], index: 1, kind: input, shape index: {}]
  %s2 = inlined_call_operand.vmem [shape: f32[1,256], index: 2, kind: input, shape index: {}]
  %s3 = inlined_call_operand.vmem [shape: f32[256,256], index: 3, kind: input, shape index: {}]
  %s4 = inlined_call_operand.vmem [shape: f32[1,256], index: 4, kind: input, shape index: {}]
  %s5 = inlined_call_operand.vmem [shape: f32[256,4], index: 5, kind: input, shape index: {}]
  %s6 = inlined_call_operand.vmem [shape: f32[1,4], index: 6, kind: input, shape index: {}]
  %s7 = inlined_call_operand.vmem [shape: f32[512,4], index: 7, kind: output, shape index: {}]
  %s8 = sld [smem:[#allocation0]]
  $region61: #{tpu_custom_call.1} parent=0
    _
  %s10 = ssub.s32 1, %s8
  %s11 = scalar_select 0, %s10, %s8
  loop: start=0, step=1, limit=4
  $region2: #{tpu_custom_call.1} parent=0 // loop_pre_header
    _
  $region3: #{tpu_custom_call.1} parent=0 // loop_header
    %s13 = sphi 0, %s17
    %p14 = scmp.ge.s32.totalorder %s13, 4
    %s23 = sphi 0, %s25
    %s26 = sphi 0, %s23
    %s27 = sphi 0, %s26
    %s43 = sphi 0, %s27
    %s47 = sphi 0, %s47
    %s49 = sphi 0, %s47
    %s50 = sphi 0, %s49
    %s64 = sphi 0, %s50
    %s68 = sphi 0, %s68
    %s70 = sphi 0, %s68
    %s71 = sphi 0, %s70
    %s85 = sphi 0, %s71
    %s89 = sphi 0, %s89
    %s91 = sphi 0, %s89
    %s92 = sphi 0, %s91
    %s106 = sphi 0, %s92
    %s110 = sphi 0, %s110
    %s112 = sphi 0, %s110
    %s113 = sphi 0, %s112
    %s127 = sphi 0, %s113
    %s131 = sphi 0, %s131
    %s133 = sphi 0, %s131
    %s134 = sphi 0, %s133
    %s148 = sphi 0, %s134
    %s152 = sphi 0, %s152
    %s154 = sphi 0, %s152
    %s155 = sphi 0, %s154
    %s169 = sphi 0, %s155
    %s175 = sphi 0, %s177
    %s178 = sphi 0, %s175
    %s179 = sphi 0, %s178
    %s195 = sphi 0, %s179
  $region4: #{tpu_custom_call.1} parent=0 // loop_header_branch
    %16 = sbr.rel (%p14) target = $region8
  $region5: #{tpu_custom_call.1} parent=0 // loop_body
    %s18 = ssub.s32 %s13, 1
    %s19 = ssub.s32 %s13, 2
    %s20 = sadd.s32 %s13, 1
    %s21 = ssub.s32 %s13, %s20
    %p22 = scmp.eq.s32.totalorder %s21, 0
    %s24 = sadd.s32 %s23, 1
    %s25 = scalar_select %p22, %s23, %s24
    %p28 = pneg %p22
    %p29 = scmp.eq.s32.totalorder %s13, 1
    %p30 = por %p28, %p29
    %p31 = scmp.ne.s32.totalorder %s23, %s26
    %p32 = scmp.eq.s32.totalorder %s13, 0
    %p33 = por %p31, %p32
    %p34 = scmp.ne.s32.totalorder %s23, %s26
    %p35 = scmp.eq.s32.totalorder %s18, 1
    %p36 = por %p34, %p35
    %p37 = scmp.ne.s32.totalorder %s26, %s27
    %p38 = scmp.eq.s32.totalorder %s18, 0
    %p39 = por %p37, %p38
    %p40 = scmp.ne.s32.totalorder %s26, %s27
    %p41 = scmp.eq.s32.totalorder %s19, 1
    %p42 = por %p40, %p41
    %p44 = scmp.ne.s32.totalorder %s27, %s43
    %p45 = scmp.eq.s32.totalorder %s19, 0
    %p46 = por %p44, %p45
    %s48 = sadd.s32 %s47, 1
    %p51 = scmp.eq.s32.totalorder %s13, 1
    %p52 = scmp.ne.s32.totalorder %s47, %s49
    %p53 = scmp.eq.s32.totalorder %s13, 0
    %p54 = por %p52, %p53
    %p55 = scmp.ne.s32.totalorder %s47, %s49
    %p56 = scmp.eq.s32.totalorder %s18, 1
    %p57 = por %p55, %p56
    %p58 = scmp.ne.s32.totalorder %s49, %s50
    %p59 = scmp.eq.s32.totalorder %s18, 0
    %p60 = por %p58, %p59
    %p61 = scmp.ne.s32.totalorder %s49, %s50
    %p62 = scmp.eq.s32.totalorder %s19, 1
    %p63 = por %p61, %p62
    %p65 = scmp.ne.s32.totalorder %s50, %s64
    %p66 = scmp.eq.s32.totalorder %s19, 0
    %p67 = por %p65, %p66
    %s69 = sadd.s32 %s68, 1
    %p72 = scmp.eq.s32.totalorder %s13, 1
    %p73 = scmp.ne.s32.totalorder %s68, %s70
    %p74 = scmp.eq.s32.totalorder %s13, 0
    %p75 = por %p73, %p74
    %p76 = scmp.ne.s32.totalorder %s68, %s70
    %p77 = scmp.eq.s32.totalorder %s18, 1
    %p78 = por %p76, %p77
    %p79 = scmp.ne.s32.totalorder %s70, %s71
    %p80 = scmp.eq.s32.totalorder %s18, 0
    %p81 = por %p79, %p80
    %p82 = scmp.ne.s32.totalorder %s70, %s71
    %p83 = scmp.eq.s32.totalorder %s19, 1
    %p84 = por %p82, %p83
    %p86 = scmp.ne.s32.totalorder %s71, %s85
    %p87 = scmp.eq.s32.totalorder %s19, 0
    %p88 = por %p86, %p87
    %s90 = sadd.s32 %s89, 1
    %p93 = scmp.eq.s32.totalorder %s13, 1
    %p94 = scmp.ne.s32.totalorder %s89, %s91
    %p95 = scmp.eq.s32.totalorder %s13, 0
    %p96 = por %p94, %p95
    %p97 = scmp.ne.s32.totalorder %s89, %s91
    %p98 = scmp.eq.s32.totalorder %s18, 1
    %p99 = por %p97, %p98
    %p100 = scmp.ne.s32.totalorder %s91, %s92
    %p101 = scmp.eq.s32.totalorder %s18, 0
    %p102 = por %p100, %p101
    %p103 = scmp.ne.s32.totalorder %s91, %s92
    %p104 = scmp.eq.s32.totalorder %s19, 1
    %p105 = por %p103, %p104
    %p107 = scmp.ne.s32.totalorder %s92, %s106
    %p108 = scmp.eq.s32.totalorder %s19, 0
    %p109 = por %p107, %p108
    %s111 = sadd.s32 %s110, 1
    %p114 = scmp.eq.s32.totalorder %s13, 1
    %p115 = scmp.ne.s32.totalorder %s110, %s112
    %p116 = scmp.eq.s32.totalorder %s13, 0
    %p117 = por %p115, %p116
    %p118 = scmp.ne.s32.totalorder %s110, %s112
    %p119 = scmp.eq.s32.totalorder %s18, 1
    %p120 = por %p118, %p119
    %p121 = scmp.ne.s32.totalorder %s112, %s113
    %p122 = scmp.eq.s32.totalorder %s18, 0
    %p123 = por %p121, %p122
    %p124 = scmp.ne.s32.totalorder %s112, %s113
    %p125 = scmp.eq.s32.totalorder %s19, 1
    %p126 = por %p124, %p125
    %p128 = scmp.ne.s32.totalorder %s113, %s127
    %p129 = scmp.eq.s32.totalorder %s19, 0
    %p130 = por %p128, %p129
    %s132 = sadd.s32 %s131, 1
    %p135 = scmp.eq.s32.totalorder %s13, 1
    %p136 = scmp.ne.s32.totalorder %s131, %s133
    %p137 = scmp.eq.s32.totalorder %s13, 0
    %p138 = por %p136, %p137
    %p139 = scmp.ne.s32.totalorder %s131, %s133
    %p140 = scmp.eq.s32.totalorder %s18, 1
    %p141 = por %p139, %p140
    %p142 = scmp.ne.s32.totalorder %s133, %s134
    %p143 = scmp.eq.s32.totalorder %s18, 0
    %p144 = por %p142, %p143
    %p145 = scmp.ne.s32.totalorder %s133, %s134
    %p146 = scmp.eq.s32.totalorder %s19, 1
    %p147 = por %p145, %p146
    %p149 = scmp.ne.s32.totalorder %s134, %s148
    %p150 = scmp.eq.s32.totalorder %s19, 0
    %p151 = por %p149, %p150
    %s153 = sadd.s32 %s152, 1
    %p156 = scmp.eq.s32.totalorder %s13, 1
    %p157 = scmp.ne.s32.totalorder %s152, %s154
    %p158 = scmp.eq.s32.totalorder %s13, 0
    %p159 = por %p157, %p158
    %p160 = scmp.ne.s32.totalorder %s152, %s154
    %p161 = scmp.eq.s32.totalorder %s18, 1
    %p162 = por %p160, %p161
    %p163 = scmp.ne.s32.totalorder %s154, %s155
    %p164 = scmp.eq.s32.totalorder %s18, 0
    %p165 = por %p163, %p164
    %p166 = scmp.ne.s32.totalorder %s154, %s155
    %p167 = scmp.eq.s32.totalorder %s19, 1
    %p168 = por %p166, %p167
    %p170 = scmp.ne.s32.totalorder %s155, %s169
    %p171 = scmp.eq.s32.totalorder %s19, 0
    %p172 = por %p170, %p171
    %s173 = ssub.s32 %s13, %s20
    %p174 = scmp.eq.s32.totalorder %s173, 0
    %s176 = sadd.s32 %s175, 1
    %s177 = scalar_select %p174, %s175, %s176
    %p180 = pneg %p174
    %p181 = scmp.eq.s32.totalorder %s13, 1
    %p182 = por %p180, %p181
    %p183 = scmp.ne.s32.totalorder %s175, %s178
    %p184 = scmp.eq.s32.totalorder %s13, 0
    %p185 = por %p183, %p184
    %p186 = scmp.ne.s32.totalorder %s175, %s178
    %p187 = scmp.eq.s32.totalorder %s18, 1
    %p188 = por %p186, %p187
    %p189 = scmp.ne.s32.totalorder %s178, %s179
    %p190 = scmp.eq.s32.totalorder %s18, 0
    %p191 = por %p189, %p190
    %p192 = scmp.ne.s32.totalorder %s178, %s179
    %p193 = scmp.eq.s32.totalorder %s19, 1
    %p194 = por %p192, %p193
    %p196 = scmp.ne.s32.totalorder %s179, %s195
    %p197 = scmp.eq.s32.totalorder %s19, 0
    %p198 = por %p196, %p197
    %p199 = scmp.le.s32.totalorder 1, %s13
    %p200 = scmp.lt.s32.totalorder %s13, 3
    %p201 = pnand %p199, %p200
    %p202 = pneg %p201
    // Predicated region
    $region9: #{tpu_custom_call.1} parent=5 // pred_check
      _
    $region10: #{tpu_custom_call.1} parent=5 // pred_check_branch
      %204 = sbr.rel (%p201) target = $region12
    $region11: #{tpu_custom_call.1} parent=5 // pred_region
      %s205 = ssub.s32 %s13, 1
      // Predicated region
      $region13: #{tpu_custom_call.1} parent=11 // pred_check
        %p206 = pneg %p60
      $region14: #{tpu_custom_call.1} parent=11 // pred_check_branch
        %208 = sbr.rel (%p206) target = $region16
      $region15: #{tpu_custom_call.1} parent=11 // pred_region
        _
      $region16: #{tpu_custom_call.1} parent=11 // pred_fallthru
        _
      // Predicated region
      $region17: #{tpu_custom_call.1} parent=11 // pred_check
        %p209 = pneg %p81
      $region18: #{tpu_custom_call.1} parent=11 // pred_check_branch
        %211 = sbr.rel (%p209) target = $region20
      $region19: #{tpu_custom_call.1} parent=11 // pred_region
        _
      $region20: #{tpu_custom_call.1} parent=11 // pred_fallthru
        _
      // Predicated region
      $region21: #{tpu_custom_call.1} parent=11 // pred_check
        %p212 = pneg %p102
      $region22: #{tpu_custom_call.1} parent=11 // pred_check_branch
        %214 = sbr.rel (%p212) target = $region24
      $region23: #{tpu_custom_call.1} parent=11 // pred_region
        _
      $region24: #{tpu_custom_call.1} parent=11 // pred_fallthru
        _
      // Predicated region
      $region25: #{tpu_custom_call.1} parent=11 // pred_check
        %p215 = pneg %p123
      $region26: #{tpu_custom_call.1} parent=11 // pred_check_branch
        %217 = sbr.rel (%p215) target = $region28
      $region27: #{tpu_custom_call.1} parent=11 // pred_region
        _
      $region28: #{tpu_custom_call.1} parent=11 // pred_fallthru
        _
      // Predicated region
      $region29: #{tpu_custom_call.1} parent=11 // pred_check
        %p218 = pneg %p144
      $region30: #{tpu_custom_call.1} parent=11 // pred_check_branch
        %220 = sbr.rel (%p218) target = $region32
      $region31: #{tpu_custom_call.1} parent=11 // pred_region
        _
      $region32: #{tpu_custom_call.1} parent=11 // pred_fallthru
        _
      // Predicated region
      $region33: #{tpu_custom_call.1} parent=11 // pred_check
        %p221 = pneg %p165
      $region34: #{tpu_custom_call.1} parent=11 // pred_check_branch
        %223 = sbr.rel (%p221) target = $region36
      $region35: #{tpu_custom_call.1} parent=11 // pred_region
        _
      $region36: #{tpu_custom_call.1} parent=11 // pred_fallthru
        _
    $region12: #{tpu_custom_call.1} parent=5 // pred_fallthru
      _
    %p224 = scmp.lt.s32.totalorder %s13, 2
    // Predicated region
    $region37: #{tpu_custom_call.1} parent=5 // pred_check
      %p225 = pneg %p224
    $region38: #{tpu_custom_call.1} parent=5 // pred_check_branch
      %227 = sbr.rel (%p225) target = $region40
    $region39: #{tpu_custom_call.1} parent=5 // pred_region
      // Predicated region
      $region41: #{tpu_custom_call.1} parent=39 // pred_check
        %p228 = pneg %p33
      $region42: #{tpu_custom_call.1} parent=39 // pred_check_branch
        %230 = sbr.rel (%p228) target = $region44
      $region43: #{tpu_custom_call.1} parent=39 // pred_region
        %s231 = smul.u32 32, %s13
        %p232 = scmp.lt.s32.totalorder %s231, 63
        %s233 = scalar_select %p232, %s231, 63
        %s234 = smul.addr %s233, 8
        %s235 = scalar_lea.vmem %s0, %s234
        %s236 = smul.u32 32, %s13
      $region44: #{tpu_custom_call.1} parent=39 // pred_fallthru
        _
    $region40: #{tpu_custom_call.1} parent=5 // pred_fallthru
      _
    %p237 = scmp.le.s32.totalorder 1, %s13
    %p238 = scmp.lt.s32.totalorder %s13, 3
    %p239 = pnand %p237, %p238
    %p240 = pneg %p239
    // Predicated region
    $region45: #{tpu_custom_call.1} parent=5 // pred_check
      _
    $region46: #{tpu_custom_call.1} parent=5 // pred_check_branch
      %242 = sbr.rel (%p239) target = $region48
    $region47: #{tpu_custom_call.1} parent=5 // pred_region
      %s243 = ssub.s32 %s13, 1
      %s244 = smul.u32 32, %s18
      %p245 = scmp.lt.s32.totalorder %s244, 63
      %s246 = scalar_select %p245, %s244, 63
      %s247 = smul.addr %s246, 8
      %s248 = scalar_lea.vmem %s0, %s247
      %p249 = pneg %p39
      %p250 = pneg %p36
      %p251 = pneg %p60
      %p252 = pneg %p57
      %p253 = pneg %p81
      %p254 = pneg %p78
      %p255 = pneg %p102
      %p256 = pneg %p99
      %p257 = pneg %p123
      %p258 = pneg %p120
      %p259 = pneg %p144
      %p260 = pneg %p141
      %p261 = pneg %p165
      %p262 = pneg %p162
      %p263 = pneg %p191
      %p264 = pneg %p188
      %s265 = smul.u32 32, %s18
      %p266 = scmp.lt.s32.totalorder %s265, 63
      %s267 = scalar_select %p266, %s265, 63
      %s268 = smul.addr %s267, 8
      %s269 = scalar_lea.vmem %s7, %s268
      %s270 = smul.u32 32, %s18
      %p271 = scmp.lt.s32.totalorder %s270, 63
      %s272 = scalar_select %p271, %s270, 63
      %s273 = smul.addr %s272, 8
      %s274 = scalar_lea.vmem %s0, %s273
      %s275 = smul.u32 32, %s18
      %s276 = smul.u32 32, %s18
      %p277 = scmp.lt.s32.totalorder %s276, 63
      %s278 = scalar_select %p277, %s276, 63
      %s279 = smul.addr %s278, 8
      %s280 = scalar_lea.vmem %s7, %s279
      %s281 = smul.u32 32, %s18
      %v282 = vld [vmem:[%s274] sm:$0xff]
      %v283 = vld [vmem:[%s274 + $0x8] sm:$0xff]
      %v284 = vld [vmem:[%s274 + $0x10] sm:$0xff]
      %v285 = vld [vmem:[%s274 + $0x18] sm:$0xff]
      %v286 = vld [vmem:[%s274 + $0x20] sm:$0xff]
      %v287 = vld [vmem:[%s274 + $0x28] sm:$0xff]
      %v288 = vld [vmem:[%s274 + $0x30] sm:$0xff]
      %v289 = vld [vmem:[%s274 + $0x38] sm:$0xff]
      %v290 = vld [vmem:[%s274 + $0x40] sm:$0xff]
      %v291 = vld [vmem:[%s274 + $0x48] sm:$0xff]
      %v292 = vld [vmem:[%s274 + $0x50] sm:$0xff]
      %v293 = vld [vmem:[%s274 + $0x58] sm:$0xff]
      %v294 = vld [vmem:[%s274 + $0x60] sm:$0xff]
      %v295 = vld [vmem:[%s274 + $0x68] sm:$0xff]
      %v296 = vld [vmem:[%s274 + $0x70] sm:$0xff]
      %v297 = vld [vmem:[%s274 + $0x78] sm:$0xff]
      %v298 = vld [vmem:[%s274 + $0x80] sm:$0xff]
      %v299 = vld [vmem:[%s274 + $0x88] sm:$0xff]
      %v300 = vld [vmem:[%s274 + $0x90] sm:$0xff]
      %v301 = vld [vmem:[%s274 + $0x98] sm:$0xff]
      %v302 = vld [vmem:[%s274 + $0xa0] sm:$0xff]
      %v303 = vld [vmem:[%s274 + $0xa8] sm:$0xff]
      %v304 = vld [vmem:[%s274 + $0xb0] sm:$0xff]
      %v305 = vld [vmem:[%s274 + $0xb8] sm:$0xff]
      %v306 = vld [vmem:[%s274 + $0xc0] sm:$0xff]
      %v307 = vld [vmem:[%s274 + $0xc8] sm:$0xff]
      %v308 = vld [vmem:[%s274 + $0xd0] sm:$0xff]
      %v309 = vld [vmem:[%s274 + $0xd8] sm:$0xff]
      %v310 = vld [vmem:[%s274 + $0xe0] sm:$0xff]
      %v311 = vld [vmem:[%s274 + $0xe8] sm:$0xff]
      %v312 = vld [vmem:[%s274 + $0xf0] sm:$0xff]
      %v313 = vld [vmem:[%s274 + $0xf8] sm:$0xff]
      %v314 = vld [vmem:[%s1] sm:$0xff]
      %v315 = vld [vmem:[%s1 + $0x8] sm:$0xff]
      %v316 = vld [vmem:[%s1 + $0x10] sm:$0xff]
      %v317 = vld [vmem:[%s1 + $0x18] sm:$0xff]
      %v318 = vld [vmem:[%s2] sm:$0x3]
      %v320 = vlaneseq
      %v321 = vshrl.u32 %v320, 7
      %v322 = vsub.s32 0, %v321
      %v323 = vrot.slane %v318, %v322
      %v324 = vlaneseq
      %v325 = vshrl.u32 %v324, 7
      %v326 = vsub.s32 1, %v325
      %v327 = vrot.slane %v318, %v326
      %vm330 = vcmask 130048
      %v332 = vsel %vm330, %v282, 0
      %v335 = vsel %vm330, %v283, 0
      %v338 = vsel %vm330, %v284, 0
      %v341 = vsel %vm330, %v285, 0
      %v344 = vsel %vm330, %v286, 0
      %v347 = vsel %vm330, %v287, 0
      %v350 = vsel %vm330, %v288, 0
      %v353 = vsel %vm330, %v289, 0
      %v356 = vsel %vm330, %v290, 0
      %v359 = vsel %vm330, %v291, 0
      %v362 = vsel %vm330, %v292, 0
      %v365 = vsel %vm330, %v293, 0
      %v368 = vsel %vm330, %v294, 0
      %v371 = vsel %vm330, %v295, 0
      %v374 = vsel %vm330, %v296, 0
      %v377 = vsel %vm330, %v297, 0
      %v380 = vsel %vm330, %v298, 0
      %v383 = vsel %vm330, %v299, 0
      %v386 = vsel %vm330, %v300, 0
      %v389 = vsel %vm330, %v301, 0
      %v392 = vsel %vm330, %v302, 0
      %v395 = vsel %vm330, %v303, 0
      %v398 = vsel %vm330, %v304, 0
      %v401 = vsel %vm330, %v305, 0
      %v404 = vsel %vm330, %v306, 0
      %v407 = vsel %vm330, %v307, 0
      %v410 = vsel %vm330, %v308, 0
      %v413 = vsel %vm330, %v309, 0
      %v416 = vsel %vm330, %v310, 0
      %v419 = vsel %vm330, %v311, 0
      %v422 = vsel %vm330, %v312, 0
      %v425 = vsel %vm330, %v313, 0
      %427 = vmatprep.subr.mxu0 %v315
      %428 = vmatpush1.msra.mxu0 %v314
      %429 = vmatprep.subr.mxu0 %v317
      %430 = vmatpush1.msra.mxu0 %v316
      %431 = vmatprep.subr.mxu0 0.0
      %432 = vmatpush1.msra.mxu0 0.0
      %433 = vmatprep.subr.mxu0 0.0
      %434 = vmatpush1.msra.mxu0 0.0
      %435 = vmatprep.subr.mxu0 0.0
      %436 = vmatpush1.msra.mxu0 0.0
      %437 = vmatprep.subr.mxu0 0.0
      %438 = vmatpush1.msra.mxu0 0.0
      %439 = vmatprep.subr.mxu0 0.0
      %440 = vmatpush1.msra.mxu0 0.0
      %441 = vmatprep.subr.mxu0 0.0
      %442 = vmatpush1.msra.mxu0 0.0
      %443 = vmatprep.subr.mxu0 0.0
      %444 = vmatpush1.msra.mxu0 0.0
      %445 = vmatprep.subr.mxu0 0.0
      %446 = vmatpush1.msra.mxu0 0.0
      %447 = vmatprep.subr.mxu0 0.0
      %448 = vmatpush1.msra.mxu0 0.0
      %449 = vmatprep.subr.mxu0 0.0
      %450 = vmatpush1.msra.mxu0 0.0
      %451 = vmatprep.subr.mxu0 0.0
      %452 = vmatpush1.msra.mxu0 0.0
      %453 = vmatprep.subr.mxu0 0.0
      %454 = vmatpush1.msra.mxu0 0.0
      %455 = vmatprep.subr.mxu0 0.0
      %456 = vmatpush1.msra.mxu0 0.0
      %457 = vmatprep.subr.mxu0 0.0
      %458 = vmatpush1.msra.mxu0 0.0
      %459 = vmatprep.subr.mxu0 0.0
      %460 = vmatpush1.msra.mxu0 0.0
      %461 = vmatprep.subr.mxu0 0.0
      %462 = vmatpush1.msra.mxu0 0.0
      %463 = vmatprep.subr.mxu0 0.0
      %464 = vmatpush1.msra.mxu0 0.0
      %465 = vmatprep.subr.mxu0 0.0
      %466 = vmatpush1.msra.mxu0 0.0
      %467 = vmatprep.subr.mxu0 0.0
      %468 = vmatpush1.msra.mxu0 0.0
      %469 = vmatprep.subr.mxu0 0.0
      %470 = vmatpush1.msra.mxu0 0.0
      %471 = vmatprep.subr.mxu0 0.0
      %472 = vmatpush1.msra.mxu0 0.0
      %473 = vmatprep.subr.mxu0 0.0
      %474 = vmatpush1.msra.mxu0 0.0
      %475 = vmatprep.subr.mxu0 0.0
      %476 = vmatpush1.msra.mxu0 0.0
      %477 = vmatprep.subr.mxu0 0.0
      %478 = vmatpush1.msra.mxu0 0.0
      %479 = vmatprep.subr.mxu0 0.0
      %480 = vmatpush1.msra.mxu0 0.0
      %481 = vmatprep.subr.mxu0 0.0
      %482 = vmatpush1.msra.mxu0 0.0
      %483 = vmatprep.subr.mxu0 0.0
      %484 = vmatpush1.msra.mxu0 0.0
      %485 = vmatprep.subr.mxu0 0.0
      %486 = vmatpush1.msra.mxu0 0.0
      %487 = vmatprep.subr.mxu0 0.0
      %488 = vmatpush1.msra.mxu0 0.0
      %489 = vmatprep.subr.mxu0 0.0
      %490 = vmatpush1.msra.mxu0 0.0
      %491 = vmatprep.mubr.f32.mxu0 0.0
      %492 = vmatmul.mubr.f32.gmra.mrb[0].mxu0 %v332
      %v493 = vpop.f32.mrb[0].mxu0
      %v494 = vadd.f32 %v323, %v493
      %v495 = vpop.f32.mrb[0].mxu0
      %v496 = vadd.f32 %v327, %v495
      %497 = vmatprep.mubr.f32.mxu0 0.0
      %498 = vmatmul.mubr.f32.gmra.mrb[0].mxu0 %v335
      %v499 = vpop.f32.mrb[0].mxu0
      %v500 = vadd.f32 %v323, %v499
      %v501 = vpop.f32.mrb[0].mxu0
      %v502 = vadd.f32 %v327, %v501
      %503 = vmatprep.mubr.f32.mxu0 0.0
      %504 = vmatmul.mubr.f32.gmra.mrb[0].mxu0 %v338
      %v505 = vpop.f32.mrb[0].mxu0
      %v506 = vadd.f32 %v323, %v505
      %v507 = vpop.f32.mrb[0].mxu0
      %v508 = vadd.f32 %v327, %v507
      %509 = vmatprep.mubr.f32.mxu0 0.0
      %510 = vmatmul.mubr.f32.gmra.mrb[0].mxu0 %v341
      %v511 = vpop.f32.mrb[0].mxu0
      %v512 = vadd.f32 %v323, %v511
      %v513 = vpop.f32.mrb[0].mxu0
      %v514 = vadd.f32 %v327, %v513
      %515 = vmatprep.mubr.f32.mxu0 0.0
      %516 = vmatmul.mubr.f32.gmra.mrb[0].mxu0 %v344
      %v517 = vpop.f32.mrb[0].mxu0
      %v518 = vadd.f32 %v323, %v517
      %v519 = vpop.f32.mrb[0].mxu0
      %v520 = vadd.f32 %v327, %v519
      %521 = vmatprep.mubr.f32.mxu0 0.0
      %522 = vmatmul.mubr.f32.gmra.mrb[0].mxu0 %v347
      %v523 = vpop.f32.mrb[0].mxu0
      %v524 = vadd.f32 %v323, %v523
      %v525 = vpop.f32.mrb[0].mxu0
      %v526 = vadd.f32 %v327, %v525
      %527 = vmatprep.mubr.f32.mxu0 0.0
      %528 = vmatmul.mubr.f32.gmra.mrb[0].mxu0 %v350
      %v529 = vpop.f32.mrb[0].mxu0
      %v530 = vadd.f32 %v323, %v529
      %v531 = vpop.f32.mrb[0].mxu0
      %v532 = vadd.f32 %v327, %v531
      %533 = vmatprep.mubr.f32.mxu0 0.0
      %534 = vmatmul.mubr.f32.gmra.mrb[0].mxu0 %v353
      %v535 = vpop.f32.mrb[0].mxu0
      %v536 = vadd.f32 %v323, %v535
      %v537 = vpop.f32.mrb[0].mxu0
      %v538 = vadd.f32 %v327, %v537
      %539 = vmatprep.mubr.f32.mxu0 0.0
      %540 = vmatmul.mubr.f32.gmra.mrb[0].mxu0 %v356
      %v541 = vpop.f32.mrb[0].mxu0
      %v542 = vadd.f32 %v323, %v541
      %v543 = vpop.f32.mrb[0].mxu0
      %v544 = vadd.f32 %v327, %v543
      %545 = vmatprep.mubr.f32.mxu0 0.0
      %546 = vmatmul.mubr.f32.gmra.mrb[0].mxu0 %v359
      %v547 = vpop.f32.mrb[0].mxu0
      %v548 = vadd.f32 %v323, %v547
      %v549 = vpop.f32.mrb[0].mxu0
      %v550 = vadd.f32 %v327, %v549
      %551 = vmatprep.mubr.f32.mxu0 0.0
      %552 = vmatmul.mubr.f32.gmra.mrb[0].mxu0 %v362
      %v553 = vpop.f32.mrb[0].mxu0
      %v554 = vadd.f32 %v323, %v553
      %v555 = vpop.f32.mrb[0].mxu0
      %v556 = vadd.f32 %v327, %v555
      %557 = vmatprep.mubr.f32.mxu0 0.0
      %558 = vmatmul.mubr.f32.gmra.mrb[0].mxu0 %v365
      %v559 = vpop.f32.mrb[0].mxu0
      %v560 = vadd.f32 %v323, %v559
      %v561 = vpop.f32.mrb[0].mxu0
      %v562 = vadd.f32 %v327, %v561
      %563 = vmatprep.mubr.f32.mxu0 0.0
      %564 = vmatmul.mubr.f32.gmra.mrb[0].mxu0 %v368
      %v565 = vpop.f32.mrb[0].mxu0
      %v566 = vadd.f32 %v323, %v565
      %v567 = vpop.f32.mrb[0].mxu0
      %v568 = vadd.f32 %v327, %v567
      %569 = vmatprep.mubr.f32.mxu0 0.0
      %570 = vmatmul.mubr.f32.gmra.mrb[0].mxu0 %v371
      %v571 = vpop.f32.mrb[0].mxu0
      %v572 = vadd.f32 %v323, %v571
      %v573 = vpop.f32.mrb[0].mxu0
      %v574 = vadd.f32 %v327, %v573
      %575 = vmatprep.mubr.f32.mxu0 0.0
      %576 = vmatmul.mubr.f32.gmra.mrb[0].mxu0 %v374
      %v577 = vpop.f32.mrb[0].mxu0
      %v578 = vadd.f32 %v323, %v577
      %v579 = vpop.f32.mrb[0].mxu0
      %v580 = vadd.f32 %v327, %v579
      %581 = vmatprep.mubr.f32.mxu0 0.0
      %582 = vmatmul.mubr.f32.gmra.mrb[0].mxu0 %v377
      %v583 = vpop.f32.mrb[0].mxu0
      %v584 = vadd.f32 %v323, %v583
      %v585 = vpop.f32.mrb[0].mxu0
      %v586 = vadd.f32 %v327, %v585
      %587 = vmatprep.mubr.f32.mxu0 0.0
      %588 = vmatmul.mubr.f32.gmra.mrb[0].mxu0 %v380
      %v589 = vpop.f32.mrb[0].mxu0
      %v590 = vadd.f32 %v323, %v589
      %v591 = vpop.f32.mrb[0].mxu0
      %v592 = vadd.f32 %v327, %v591
      %593 = vmatprep.mubr.f32.mxu0 0.0
      %594 = vmatmul.mubr.f32.gmra.mrb[0].mxu0 %v383
      %v595 = vpop.f32.mrb[0].mxu0
      %v596 = vadd.f32 %v323, %v595
      %v597 = vpop.f32.mrb[0].mxu0
      %v598 = vadd.f32 %v327, %v597
      %599 = vmatprep.mubr.f32.mxu0 0.0
      %600 = vmatmul.mubr.f32.gmra.mrb[0].mxu0 %v386
      %v601 = vpop.f32.mrb[0].mxu0
      %v602 = vadd.f32 %v323, %v601
      %v603 = vpop.f32.mrb[0].mxu0
      %v604 = vadd.f32 %v327, %v603
      %605 = vmatprep.mubr.f32.mxu0 0.0
      %606 = vmatmul.mubr.f32.gmra.mrb[0].mxu0 %v389
      %v607 = vpop.f32.mrb[0].mxu0
      %v608 = vadd.f32 %v323, %v607
      %v609 = vpop.f32.mrb[0].mxu0
      %v610 = vadd.f32 %v327, %v609
      %611 = vmatprep.mubr.f32.mxu0 0.0
      %612 = vmatmul.mubr.f32.gmra.mrb[0].mxu0 %v392
      %v613 = vpop.f32.mrb[0].mxu0
      %v614 = vadd.f32 %v323, %v613
      %v615 = vpop.f32.mrb[0].mxu0
      %v616 = vadd.f32 %v327, %v615
      %617 = vmatprep.mubr.f32.mxu0 0.0
      %618 = vmatmul.mubr.f32.gmra.mrb[0].mxu0 %v395
      %v619 = vpop.f32.mrb[0].mxu0
      %v620 = vadd.f32 %v323, %v619
      %v621 = vpop.f32.mrb[0].mxu0
      %v622 = vadd.f32 %v327, %v621
      %623 = vmatprep.mubr.f32.mxu0 0.0
      %624 = vmatmul.mubr.f32.gmra.mrb[0].mxu0 %v398
      %v625 = vpop.f32.mrb[0].mxu0
      %v626 = vadd.f32 %v323, %v625
      %v627 = vpop.f32.mrb[0].mxu0
      %v628 = vadd.f32 %v327, %v627
      %629 = vmatprep.mubr.f32.mxu0 0.0
      %630 = vmatmul.mubr.f32.gmra.mrb[0].mxu0 %v401
      %v631 = vpop.f32.mrb[0].mxu0
      %v632 = vadd.f32 %v323, %v631
      %v633 = vpop.f32.mrb[0].mxu0
      %v634 = vadd.f32 %v327, %v633
      %635 = vmatprep.mubr.f32.mxu0 0.0
      %636 = vmatmul.mubr.f32.gmra.mrb[0].mxu0 %v404
      %v637 = vpop.f32.mrb[0].mxu0
      %v638 = vadd.f32 %v323, %v637
      %v639 = vpop.f32.mrb[0].mxu0
      %v640 = vadd.f32 %v327, %v639
      %641 = vmatprep.mubr.f32.mxu0 0.0
      %642 = vmatmul.mubr.f32.gmra.mrb[0].mxu0 %v407
      %v643 = vpop.f32.mrb[0].mxu0
      %v644 = vadd.f32 %v323, %v643
      %v645 = vpop.f32.mrb[0].mxu0
      %v646 = vadd.f32 %v327, %v645
      %647 = vmatprep.mubr.f32.mxu0 0.0
      %648 = vmatmul.mubr.f32.gmra.mrb[0].mxu0 %v410
      %v649 = vpop.f32.mrb[0].mxu0
      %v650 = vadd.f32 %v323, %v649
      %v651 = vpop.f32.mrb[0].mxu0
      %v652 = vadd.f32 %v327, %v651
      %653 = vmatprep.mubr.f32.mxu0 0.0
      %654 = vmatmul.mubr.f32.gmra.mrb[0].mxu0 %v413
      %v655 = vpop.f32.mrb[0].mxu0
      %v656 = vadd.f32 %v323, %v655
      %v657 = vpop.f32.mrb[0].mxu0
      %v658 = vadd.f32 %v327, %v657
      %659 = vmatprep.mubr.f32.mxu0 0.0
      %660 = vmatmul.mubr.f32.gmra.mrb[0].mxu0 %v416
      %v661 = vpop.f32.mrb[0].mxu0
      %v662 = vadd.f32 %v323, %v661
      %v663 = vpop.f32.mrb[0].mxu0
      %v664 = vadd.f32 %v327, %v663
      %665 = vmatprep.mubr.f32.mxu0 0.0
      %666 = vmatmul.mubr.f32.gmra.mrb[0].mxu0 %v419
      %v667 = vpop.f32.mrb[0].mxu0
      %v668 = vadd.f32 %v323, %v667
      %v669 = vpop.f32.mrb[0].mxu0
      %v670 = vadd.f32 %v327, %v669
      %671 = vmatprep.mubr.f32.mxu0 0.0
      %672 = vmatmul.mubr.f32.gmra.mrb[0].mxu0 %v422
      %v673 = vpop.f32.mrb[0].mxu0
      %v674 = vadd.f32 %v323, %v673
      %v675 = vpop.f32.mrb[0].mxu0
      %v676 = vadd.f32 %v327, %v675
      %677 = vmatprep.mubr.f32.mxu0 0.0
      %678 = vmatmul.mubr.f32.gmra.mrb[0].mxu0 %v425
      %v679 = vpop.f32.mrb[0].mxu0
      %v680 = vadd.f32 %v323, %v679
      %v681 = vpop.f32.mrb[0].mxu0
      %v682 = vadd.f32 %v327, %v681
      %683 = vdwg.mxu0
      %v684 = vmax.f32 %v494, 0.0
      %v685 = vmax.f32 %v496, 0.0
      %v686 = vmax.f32 %v500, 0.0
      %v687 = vmax.f32 %v502, 0.0
      %v688 = vmax.f32 %v506, 0.0
      %v689 = vmax.f32 %v508, 0.0
      %v690 = vmax.f32 %v512, 0.0
      %v691 = vmax.f32 %v514, 0.0
      %v692 = vmax.f32 %v518, 0.0
      %v693 = vmax.f32 %v520, 0.0
      %v694 = vmax.f32 %v524, 0.0
      %v695 = vmax.f32 %v526, 0.0
      %v696 = vmax.f32 %v530, 0.0
      %v697 = vmax.f32 %v532, 0.0
      %v698 = vmax.f32 %v536, 0.0
      %v699 = vmax.f32 %v538, 0.0
      %v700 = vmax.f32 %v542, 0.0
      %v701 = vmax.f32 %v544, 0.0
      %v702 = vmax.f32 %v548, 0.0
      %v703 = vmax.f32 %v550, 0.0
      %v704 = vmax.f32 %v554, 0.0
      %v705 = vmax.f32 %v556, 0.0
      %v706 = vmax.f32 %v560, 0.0
      %v707 = vmax.f32 %v562, 0.0
      %v708 = vmax.f32 %v566, 0.0
      %v709 = vmax.f32 %v568, 0.0
      %v710 = vmax.f32 %v572, 0.0
      %v711 = vmax.f32 %v574, 0.0
      %v712 = vmax.f32 %v578, 0.0
      %v713 = vmax.f32 %v580, 0.0
      %v714 = vmax.f32 %v584, 0.0
      %v715 = vmax.f32 %v586, 0.0
      %v716 = vmax.f32 %v590, 0.0
      %v717 = vmax.f32 %v592, 0.0
      %v718 = vmax.f32 %v596, 0.0
      %v719 = vmax.f32 %v598, 0.0
      %v720 = vmax.f32 %v602, 0.0
      %v721 = vmax.f32 %v604, 0.0
      %v722 = vmax.f32 %v608, 0.0
      %v723 = vmax.f32 %v610, 0.0
      %v724 = vmax.f32 %v614, 0.0
      %v725 = vmax.f32 %v616, 0.0
      %v726 = vmax.f32 %v620, 0.0
      %v727 = vmax.f32 %v622, 0.0
      %v728 = vmax.f32 %v626, 0.0
      %v729 = vmax.f32 %v628, 0.0
      %v730 = vmax.f32 %v632, 0.0
      %v731 = vmax.f32 %v634, 0.0
      %v732 = vmax.f32 %v638, 0.0
      %v733 = vmax.f32 %v640, 0.0
      %v734 = vmax.f32 %v644, 0.0
      %v735 = vmax.f32 %v646, 0.0
      %v736 = vmax.f32 %v650, 0.0
      %v737 = vmax.f32 %v652, 0.0
      %v738 = vmax.f32 %v656, 0.0
      %v739 = vmax.f32 %v658, 0.0
      %v740 = vmax.f32 %v662, 0.0
      %v741 = vmax.f32 %v664, 0.0
      %v742 = vmax.f32 %v668, 0.0
      %v743 = vmax.f32 %v670, 0.0
      %v744 = vmax.f32 %v674, 0.0
      %v745 = vmax.f32 %v676, 0.0
      %v746 = vmax.f32 %v680, 0.0
      %v747 = vmax.f32 %v682, 0.0
      %v748 = vld [vmem:[%s3] sm:$0xff]
      %v749 = vld [vmem:[%s3 + $0x8] sm:$0xff]
      %v750 = vld [vmem:[%s3 + $0x10] sm:$0xff]
      %v751 = vld [vmem:[%s3 + $0x18] sm:$0xff]
      %v752 = vld [vmem:[%s3 + $0x20] sm:$0xff]
      %v753 = vld [vmem:[%s3 + $0x28] sm:$0xff]
      %v754 = vld [vmem:[%s3 + $0x30] sm:$0xff]
      %v755 = vld [vmem:[%s3 + $0x38] sm:$0xff]
      %v756 = vld [vmem:[%s3 + $0x40] sm:$0xff]
      %v757 = vld [vmem:[%s3 + $0x48] sm:$0xff]
      %v758 = vld [vmem:[%s3 + $0x50] sm:$0xff]
      %v759 = vld [vmem:[%s3 + $0x58] sm:$0xff]
      %v760 = vld [vmem:[%s3 + $0x60] sm:$0xff]
      %v761 = vld [vmem:[%s3 + $0x68] sm:$0xff]
      %v762 = vld [vmem:[%s3 + $0x70] sm:$0xff]
      %v763 = vld [vmem:[%s3 + $0x78] sm:$0xff]
      %v764 = vld [vmem:[%s3 + $0x80] sm:$0xff]
      %v765 = vld [vmem:[%s3 + $0x88] sm:$0xff]
      %v766 = vld [vmem:[%s3 + $0x90] sm:$0xff]
      %v767 = vld [vmem:[%s3 + $0x98] sm:$0xff]
      %v768 = vld [vmem:[%s3 + $0xa0] sm:$0xff]
      %v769 = vld [vmem:[%s3 + $0xa8] sm:$0xff]
      %v770 = vld [vmem:[%s3 + $0xb0] sm:$0xff]
      %v771 = vld [vmem:[%s3 + $0xb8] sm:$0xff]
      %v772 = vld [vmem:[%s3 + $0xc0] sm:$0xff]
      %v773 = vld [vmem:[%s3 + $0xc8] sm:$0xff]
      %v774 = vld [vmem:[%s3 + $0xd0] sm:$0xff]
      %v775 = vld [vmem:[%s3 + $0xd8] sm:$0xff]
      %v776 = vld [vmem:[%s3 + $0xe0] sm:$0xff]
      %v777 = vld [vmem:[%s3 + $0xe8] sm:$0xff]
      %v778 = vld [vmem:[%s3 + $0xf0] sm:$0xff]
      %v779 = vld [vmem:[%s3 + $0xf8] sm:$0xff]
      %v780 = vld [vmem:[%s3 + $0x100] sm:$0xff]
      %v781 = vld [vmem:[%s3 + $0x108] sm:$0xff]
      %v782 = vld [vmem:[%s3 + $0x110] sm:$0xff]
      %v783 = vld [vmem:[%s3 + $0x118] sm:$0xff]
      %v784 = vld [vmem:[%s3 + $0x120] sm:$0xff]
      %v785 = vld [vmem:[%s3 + $0x128] sm:$0xff]
      %v786 = vld [vmem:[%s3 + $0x130] sm:$0xff]
      %v787 = vld [vmem:[%s3 + $0x138] sm:$0xff]
      %v788 = vld [vmem:[%s3 + $0x140] sm:$0xff]
      %v789 = vld [vmem:[%s3 + $0x148] sm:$0xff]
      %v790 = vld [vmem:[%s3 + $0x150] sm:$0xff]
      %v791 = vld [vmem:[%s3 + $0x158] sm:$0xff]
      %v792 = vld [vmem:[%s3 + $0x160] sm:$0xff]
      %v793 = vld [vmem:[%s3 + $0x168] sm:$0xff]
      %v794 = vld [vmem:[%s3 + $0x170] sm:$0xff]
      %v795 = vld [vmem:[%s3 + $0x178] sm:$0xff]
      %v796 = vld [vmem:[%s3 + $0x180] sm:$0xff]
      %v797 = vld [vmem:[%s3 + $0x188] sm:$0xff]
      %v798 = vld [vmem:[%s3 + $0x190] sm:$0xff]
      %v799 = vld [vmem:[%s3 + $0x198] sm:$0xff]
      %v800 = vld [vmem:[%s3 + $0x1a0] sm:$0xff]
      %v801 = vld [vmem:[%s3 + $0x1a8] sm:$0xff]
      %v802 = vld [vmem:[%s3 + $0x1b0] sm:$0xff]
      %v803 = vld [vmem:[%s3 + $0x1b8] sm:$0xff]
      %v804 = vld [vmem:[%s3 + $0x1c0] sm:$0xff]
      %v805 = vld [vmem:[%s3 + $0x1c8] sm:$0xff]
      %v806 = vld [vmem:[%s3 + $0x1d0] sm:$0xff]
      %v807 = vld [vmem:[%s3 + $0x1d8] sm:$0xff]
      %v808 = vld [vmem:[%s3 + $0x1e0] sm:$0xff]
      %v809 = vld [vmem:[%s3 + $0x1e8] sm:$0xff]
      %v810 = vld [vmem:[%s3 + $0x1f0] sm:$0xff]
      %v811 = vld [vmem:[%s3 + $0x1f8] sm:$0xff]
      %v812 = vld [vmem:[%s4] sm:$0x3]
      %v814 = vlaneseq
      %v815 = vshrl.u32 %v814, 7
      %v816 = vsub.s32 0, %v815
      %v817 = vrot.slane %v812, %v816
      %v818 = vlaneseq
      %v819 = vshrl.u32 %v818, 7
      %v820 = vsub.s32 1, %v819
      %v821 = vrot.slane %v812, %v820
      %824 = vmatprep.subr.mxu0 %v749
      %825 = vmatpush1.msra.mxu0 %v748
      %826 = vmatprep.subr.mxu0 %v751
      %827 = vmatpush1.msra.mxu0 %v750
      %828 = vmatprep.subr.mxu0 %v753
      %829 = vmatpush1.msra.mxu0 %v752
      %830 = vmatprep.subr.mxu0 %v755
      %831 = vmatpush1.msra.mxu0 %v754
      %832 = vmatprep.subr.mxu0 %v757
      %833 = vmatpush1.msra.mxu0 %v756
      %834 = vmatprep.subr.mxu0 %v759
      %835 = vmatpush1.msra.mxu0 %v758
      %836 = vmatprep.subr.mxu0 %v761
      %837 = vmatpush1.msra.mxu0 %v760
      %838 = vmatprep.subr.mxu0 %v763
      %839 = vmatpush1.msra.mxu0 %v762
      %840 = vmatprep.subr.mxu0 %v765
      %841 = vmatpush1.msra.mxu0 %v764
      %842 = vmatprep.subr.mxu0 %v767
      %843 = vmatpush1.msra.mxu0 %v766
      %844 = vmatprep.subr.mxu0 %v769
      %845 = vmatpush1.msra.mxu0 %v768
      %846 = vmatprep.subr.mxu0 %v771
      %847 = vmatpush1.msra.mxu0 %v770
      %848 = vmatprep.subr.mxu0 %v773
      %849 = vmatpush1.msra.mxu0 %v772
      %850 = vmatprep.subr.mxu0 %v775
      %851 = vmatpush1.msra.mxu0 %v774
      %852 = vmatprep.subr.mxu0 %v777
      %853 = vmatpush1.msra.mxu0 %v776
      %854 = vmatprep.subr.mxu0 %v779
      %855 = vmatpush1.msra.mxu0 %v778
      %856 = vmatprep.subr.mxu0 %v781
      %857 = vmatpush1.msra.mxu0 %v780
      %858 = vmatprep.subr.mxu0 %v783
      %859 = vmatpush1.msra.mxu0 %v782
      %860 = vmatprep.subr.mxu0 %v785
      %861 = vmatpush1.msra.mxu0 %v784
      %862 = vmatprep.subr.mxu0 %v787
      %863 = vmatpush1.msra.mxu0 %v786
      %864 = vmatprep.subr.mxu0 %v789
      %865 = vmatpush1.msra.mxu0 %v788
      %866 = vmatprep.subr.mxu0 %v791
      %867 = vmatpush1.msra.mxu0 %v790
      %868 = vmatprep.subr.mxu0 %v793
      %869 = vmatpush1.msra.mxu0 %v792
      %870 = vmatprep.subr.mxu0 %v795
      %871 = vmatpush1.msra.mxu0 %v794
      %872 = vmatprep.subr.mxu0 %v797
      %873 = vmatpush1.msra.mxu0 %v796
      %874 = vmatprep.subr.mxu0 %v799
      %875 = vmatpush1.msra.mxu0 %v798
      %876 = vmatprep.subr.mxu0 %v801
      %877 = vmatpush1.msra.mxu0 %v800
      %878 = vmatprep.subr.mxu0 %v803
      %879 = vmatpush1.msra.mxu0 %v802
      %880 = vmatprep.subr.mxu0 %v805
      %881 = vmatpush1.msra.mxu0 %v804
      %882 = vmatprep.subr.mxu0 %v807
      %883 = vmatpush1.msra.mxu0 %v806
      %884 = vmatprep.subr.mxu0 %v809
      %885 = vmatpush1.msra.mxu0 %v808
      %886 = vmatprep.subr.mxu0 %v811
      %887 = vmatpush1.msra.mxu0 %v810
      %888 = vmatprep.mubr.f32.mxu0 %v685
      %889 = vmatmul.mubr.f32.gmra.mrb[0].mxu0 %v684
      %v890 = vpop.f32.mrb[0].mxu0
      %v891 = vadd.f32 %v817, %v890
      %v892 = vpop.f32.mrb[0].mxu0
      %v893 = vadd.f32 %v821, %v892
      %894 = vmatprep.mubr.f32.mxu0 %v687
      %895 = vmatmul.mubr.f32.gmra.mrb[0].mxu0 %v686
      %v896 = vpop.f32.mrb[0].mxu0
      %v897 = vadd.f32 %v817, %v896
      %v898 = vpop.f32.mrb[0].mxu0
      %v899 = vadd.f32 %v821, %v898
      %900 = vmatprep.mubr.f32.mxu0 %v689
      %901 = vmatmul.mubr.f32.gmra.mrb[0].mxu0 %v688
      %v902 = vpop.f32.mrb[0].mxu0
      %v903 = vadd.f32 %v817, %v902
      %v904 = vpop.f32.mrb[0].mxu0
      %v905 = vadd.f32 %v821, %v904
      %906 = vmatprep.mubr.f32.mxu0 %v691
      %907 = vmatmul.mubr.f32.gmra.mrb[0].mxu0 %v690
      %v908 = vpop.f32.mrb[0].mxu0
      %v909 = vadd.f32 %v817, %v908
      %v910 = vpop.f32.mrb[0].mxu0
      %v911 = vadd.f32 %v821, %v910
      %912 = vmatprep.mubr.f32.mxu0 %v693
      %913 = vmatmul.mubr.f32.gmra.mrb[0].mxu0 %v692
      %v914 = vpop.f32.mrb[0].mxu0
      %v915 = vadd.f32 %v817, %v914
      %v916 = vpop.f32.mrb[0].mxu0
      %v917 = vadd.f32 %v821, %v916
      %918 = vmatprep.mubr.f32.mxu0 %v695
      %919 = vmatmul.mubr.f32.gmra.mrb[0].mxu0 %v694
      %v920 = vpop.f32.mrb[0].mxu0
      %v921 = vadd.f32 %v817, %v920
      %v922 = vpop.f32.mrb[0].mxu0
      %v923 = vadd.f32 %v821, %v922
      %924 = vmatprep.mubr.f32.mxu0 %v697
      %925 = vmatmul.mubr.f32.gmra.mrb[0].mxu0 %v696
      %v926 = vpop.f32.mrb[0].mxu0
      %v927 = vadd.f32 %v817, %v926
      %v928 = vpop.f32.mrb[0].mxu0
      %v929 = vadd.f32 %v821, %v928
      %930 = vmatprep.mubr.f32.mxu0 %v699
      %931 = vmatmul.mubr.f32.gmra.mrb[0].mxu0 %v698
      %v932 = vpop.f32.mrb[0].mxu0
      %v933 = vadd.f32 %v817, %v932
      %v934 = vpop.f32.mrb[0].mxu0
      %v935 = vadd.f32 %v821, %v934
      %936 = vmatprep.mubr.f32.mxu0 %v701
      %937 = vmatmul.mubr.f32.gmra.mrb[0].mxu0 %v700
      %v938 = vpop.f32.mrb[0].mxu0
      %v939 = vadd.f32 %v817, %v938
      %v940 = vpop.f32.mrb[0].mxu0
      %v941 = vadd.f32 %v821, %v940
      %942 = vmatprep.mubr.f32.mxu0 %v703
      %943 = vmatmul.mubr.f32.gmra.mrb[0].mxu0 %v702
      %v944 = vpop.f32.mrb[0].mxu0
      %v945 = vadd.f32 %v817, %v944
      %v946 = vpop.f32.mrb[0].mxu0
      %v947 = vadd.f32 %v821, %v946
      %948 = vmatprep.mubr.f32.mxu0 %v705
      %949 = vmatmul.mubr.f32.gmra.mrb[0].mxu0 %v704
      %v950 = vpop.f32.mrb[0].mxu0
      %v951 = vadd.f32 %v817, %v950
      %v952 = vpop.f32.mrb[0].mxu0
      %v953 = vadd.f32 %v821, %v952
      %954 = vmatprep.mubr.f32.mxu0 %v707
      %955 = vmatmul.mubr.f32.gmra.mrb[0].mxu0 %v706
      %v956 = vpop.f32.mrb[0].mxu0
      %v957 = vadd.f32 %v817, %v956
      %v958 = vpop.f32.mrb[0].mxu0
      %v959 = vadd.f32 %v821, %v958
      %960 = vmatprep.mubr.f32.mxu0 %v709
      %961 = vmatmul.mubr.f32.gmra.mrb[0].mxu0 %v708
      %v962 = vpop.f32.mrb[0].mxu0
      %v963 = vadd.f32 %v817, %v962
      %v964 = vpop.f32.mrb[0].mxu0
      %v965 = vadd.f32 %v821, %v964
      %966 = vmatprep.mubr.f32.mxu0 %v711
      %967 = vmatmul.mubr.f32.gmra.mrb[0].mxu0 %v710
      %v968 = vpop.f32.mrb[0].mxu0
      %v969 = vadd.f32 %v817, %v968
      %v970 = vpop.f32.mrb[0].mxu0
      %v971 = vadd.f32 %v821, %v970
      %972 = vmatprep.mubr.f32.mxu0 %v713
      %973 = vmatmul.mubr.f32.gmra.mrb[0].mxu0 %v712
      %v974 = vpop.f32.mrb[0].mxu0
      %v975 = vadd.f32 %v817, %v974
      %v976 = vpop.f32.mrb[0].mxu0
      %v977 = vadd.f32 %v821, %v976
      %978 = vmatprep.mubr.f32.mxu0 %v715
      %979 = vmatmul.mubr.f32.gmra.mrb[0].mxu0 %v714
      %v980 = vpop.f32.mrb[0].mxu0
      %v981 = vadd.f32 %v817, %v980
      %v982 = vpop.f32.mrb[0].mxu0
      %v983 = vadd.f32 %v821, %v982
      %984 = vmatprep.mubr.f32.mxu0 %v717
      %985 = vmatmul.mubr.f32.gmra.mrb[0].mxu0 %v716
      %v986 = vpop.f32.mrb[0].mxu0
      %v987 = vadd.f32 %v817, %v986
      %v988 = vpop.f32.mrb[0].mxu0
      %v989 = vadd.f32 %v821, %v988
      %990 = vmatprep.mubr.f32.mxu0 %v719
      %991 = vmatmul.mubr.f32.gmra.mrb[0].mxu0 %v718
      %v992 = vpop.f32.mrb[0].mxu0
      %v993 = vadd.f32 %v817, %v992
      %v994 = vpop.f32.mrb[0].mxu0
      %v995 = vadd.f32 %v821, %v994
      %996 = vmatprep.mubr.f32.mxu0 %v721
      %997 = vmatmul.mubr.f32.gmra.mrb[0].mxu0 %v720
      %v998 = vpop.f32.mrb[0].mxu0
      %v999 = vadd.f32 %v817, %v998
      %v1000 = vpop.f32.mrb[0].mxu0
      %v1001 = vadd.f32 %v821, %v1000
      %1002 = vmatprep.mubr.f32.mxu0 %v723
      %1003 = vmatmul.mubr.f32.gmra.mrb[0].mxu0 %v722
      %v1004 = vpop.f32.mrb[0].mxu0
      %v1005 = vadd.f32 %v817, %v1004
      %v1006 = vpop.f32.mrb[0].mxu0
      %v1007 = vadd.f32 %v821, %v1006
      %1008 = vmatprep.mubr.f32.mxu0 %v725
      %1009 = vmatmul.mubr.f32.gmra.mrb[0].mxu0 %v724
      %v1010 = vpop.f32.mrb[0].mxu0
      %v1011 = vadd.f32 %v817, %v1010
      %v1012 = vpop.f32.mrb[0].mxu0
      %v1013 = vadd.f32 %v821, %v1012
      %1014 = vmatprep.mubr.f32.mxu0 %v727
      %1015 = vmatmul.mubr.f32.gmra.mrb[0].mxu0 %v726
      %v1016 = vpop.f32.mrb[0].mxu0
      %v1017 = vadd.f32 %v817, %v1016
      %v1018 = vpop.f32.mrb[0].mxu0
      %v1019 = vadd.f32 %v821, %v1018
      %1020 = vmatprep.mubr.f32.mxu0 %v729
      %1021 = vmatmul.mubr.f32.gmra.mrb[0].mxu0 %v728
      %v1022 = vpop.f32.mrb[0].mxu0
      %v1023 = vadd.f32 %v817, %v1022
      %v1024 = vpop.f32.mrb[0].mxu0
      %v1025 = vadd.f32 %v821, %v1024
      %1026 = vmatprep.mubr.f32.mxu0 %v731
      %1027 = vmatmul.mubr.f32.gmra.mrb[0].mxu0 %v730
      %v1028 = vpop.f32.mrb[0].mxu0
      %v1029 = vadd.f32 %v817, %v1028
      %v1030 = vpop.f32.mrb[0].mxu0
      %v1031 = vadd.f32 %v821, %v1030
      %1032 = vmatprep.mubr.f32.mxu0 %v733
      %1033 = vmatmul.mubr.f32.gmra.mrb[0].mxu0 %v732
      %v1034 = vpop.f32.mrb[0].mxu0
      %v1035 = vadd.f32 %v817, %v1034
      %v1036 = vpop.f32.mrb[0].mxu0
      %v1037 = vadd.f32 %v821, %v1036
      %1038 = vmatprep.mubr.f32.mxu0 %v735
      %1039 = vmatmul.mubr.f32.gmra.mrb[0].mxu0 %v734
      %v1040 = vpop.f32.mrb[0].mxu0
      %v1041 = vadd.f32 %v817, %v1040
      %v1042 = vpop.f32.mrb[0].mxu0
      %v1043 = vadd.f32 %v821, %v1042
      %1044 = vmatprep.mubr.f32.mxu0 %v737
      %1045 = vmatmul.mubr.f32.gmra.mrb[0].mxu0 %v736
      %v1046 = vpop.f32.mrb[0].mxu0
      %v1047 = vadd.f32 %v817, %v1046
      %v1048 = vpop.f32.mrb[0].mxu0
      %v1049 = vadd.f32 %v821, %v1048
      %1050 = vmatprep.mubr.f32.mxu0 %v739
      %1051 = vmatmul.mubr.f32.gmra.mrb[0].mxu0 %v738
      %v1052 = vpop.f32.mrb[0].mxu0
      %v1053 = vadd.f32 %v817, %v1052
      %v1054 = vpop.f32.mrb[0].mxu0
      %v1055 = vadd.f32 %v821, %v1054
      %1056 = vmatprep.mubr.f32.mxu0 %v741
      %1057 = vmatmul.mubr.f32.gmra.mrb[0].mxu0 %v740
      %v1058 = vpop.f32.mrb[0].mxu0
      %v1059 = vadd.f32 %v817, %v1058
      %v1060 = vpop.f32.mrb[0].mxu0
      %v1061 = vadd.f32 %v821, %v1060
      %1062 = vmatprep.mubr.f32.mxu0 %v743
      %1063 = vmatmul.mubr.f32.gmra.mrb[0].mxu0 %v742
      %v1064 = vpop.f32.mrb[0].mxu0
      %v1065 = vadd.f32 %v817, %v1064
      %v1066 = vpop.f32.mrb[0].mxu0
      %v1067 = vadd.f32 %v821, %v1066
      %1068 = vmatprep.mubr.f32.mxu0 %v745
      %1069 = vmatmul.mubr.f32.gmra.mrb[0].mxu0 %v744
      %v1070 = vpop.f32.mrb[0].mxu0
      %v1071 = vadd.f32 %v817, %v1070
      %v1072 = vpop.f32.mrb[0].mxu0
      %v1073 = vadd.f32 %v821, %v1072
      %1074 = vmatprep.mubr.f32.mxu0 %v747
      %1075 = vmatmul.mubr.f32.gmra.mrb[0].mxu0 %v746
      %v1076 = vpop.f32.mrb[0].mxu0
      %v1077 = vadd.f32 %v817, %v1076
      %v1078 = vpop.f32.mrb[0].mxu0
      %v1079 = vadd.f32 %v821, %v1078
      %1080 = vdwg.mxu0
      %v1081 = vmax.f32 %v891, 0.0
      %v1082 = vmax.f32 %v893, 0.0
      %v1083 = vmax.f32 %v897, 0.0
      %v1084 = vmax.f32 %v899, 0.0
      %v1085 = vmax.f32 %v903, 0.0
      %v1086 = vmax.f32 %v905, 0.0
      %v1087 = vmax.f32 %v909, 0.0
      %v1088 = vmax.f32 %v911, 0.0
      %v1089 = vmax.f32 %v915, 0.0
      %v1090 = vmax.f32 %v917, 0.0
      %v1091 = vmax.f32 %v921, 0.0
      %v1092 = vmax.f32 %v923, 0.0
      %v1093 = vmax.f32 %v927, 0.0
      %v1094 = vmax.f32 %v929, 0.0
      %v1095 = vmax.f32 %v933, 0.0
      %v1096 = vmax.f32 %v935, 0.0
      %v1097 = vmax.f32 %v939, 0.0
      %v1098 = vmax.f32 %v941, 0.0
      %v1099 = vmax.f32 %v945, 0.0
      %v1100 = vmax.f32 %v947, 0.0
      %v1101 = vmax.f32 %v951, 0.0
      %v1102 = vmax.f32 %v953, 0.0
      %v1103 = vmax.f32 %v957, 0.0
      %v1104 = vmax.f32 %v959, 0.0
      %v1105 = vmax.f32 %v963, 0.0
      %v1106 = vmax.f32 %v965, 0.0
      %v1107 = vmax.f32 %v969, 0.0
      %v1108 = vmax.f32 %v971, 0.0
      %v1109 = vmax.f32 %v975, 0.0
      %v1110 = vmax.f32 %v977, 0.0
      %v1111 = vmax.f32 %v981, 0.0
      %v1112 = vmax.f32 %v983, 0.0
      %v1113 = vmax.f32 %v987, 0.0
      %v1114 = vmax.f32 %v989, 0.0
      %v1115 = vmax.f32 %v993, 0.0
      %v1116 = vmax.f32 %v995, 0.0
      %v1117 = vmax.f32 %v999, 0.0
      %v1118 = vmax.f32 %v1001, 0.0
      %v1119 = vmax.f32 %v1005, 0.0
      %v1120 = vmax.f32 %v1007, 0.0
      %v1121 = vmax.f32 %v1011, 0.0
      %v1122 = vmax.f32 %v1013, 0.0
      %v1123 = vmax.f32 %v1017, 0.0
      %v1124 = vmax.f32 %v1019, 0.0
      %v1125 = vmax.f32 %v1023, 0.0
      %v1126 = vmax.f32 %v1025, 0.0
      %v1127 = vmax.f32 %v1029, 0.0
      %v1128 = vmax.f32 %v1031, 0.0
      %v1129 = vmax.f32 %v1035, 0.0
      %v1130 = vmax.f32 %v1037, 0.0
      %v1131 = vmax.f32 %v1041, 0.0
      %v1132 = vmax.f32 %v1043, 0.0
      %v1133 = vmax.f32 %v1047, 0.0
      %v1134 = vmax.f32 %v1049, 0.0
      %v1135 = vmax.f32 %v1053, 0.0
      %v1136 = vmax.f32 %v1055, 0.0
      %v1137 = vmax.f32 %v1059, 0.0
      %v1138 = vmax.f32 %v1061, 0.0
      %v1139 = vmax.f32 %v1065, 0.0
      %v1140 = vmax.f32 %v1067, 0.0
      %v1141 = vmax.f32 %v1071, 0.0
      %v1142 = vmax.f32 %v1073, 0.0
      %v1143 = vmax.f32 %v1077, 0.0
      %v1144 = vmax.f32 %v1079, 0.0
      %v1145 = vld [vmem:[%s5] sm:$0xff]
      %v1146 = vld [vmem:[%s5 + $0x8] sm:$0xff]
      %v1147 = vld [vmem:[%s5 + $0x10] sm:$0xff]
      %v1148 = vld [vmem:[%s5 + $0x18] sm:$0xff]
      %v1149 = vld [vmem:[%s5 + $0x20] sm:$0xff]
      %v1150 = vld [vmem:[%s5 + $0x28] sm:$0xff]
      %v1151 = vld [vmem:[%s5 + $0x30] sm:$0xff]
      %v1152 = vld [vmem:[%s5 + $0x38] sm:$0xff]
      %v1153 = vld [vmem:[%s5 + $0x40] sm:$0xff]
      %v1154 = vld [vmem:[%s5 + $0x48] sm:$0xff]
      %v1155 = vld [vmem:[%s5 + $0x50] sm:$0xff]
      %v1156 = vld [vmem:[%s5 + $0x58] sm:$0xff]
      %v1157 = vld [vmem:[%s5 + $0x60] sm:$0xff]
      %v1158 = vld [vmem:[%s5 + $0x68] sm:$0xff]
      %v1159 = vld [vmem:[%s5 + $0x70] sm:$0xff]
      %v1160 = vld [vmem:[%s5 + $0x78] sm:$0xff]
      %v1161 = vld [vmem:[%s5 + $0x80] sm:$0xff]
      %v1162 = vld [vmem:[%s5 + $0x88] sm:$0xff]
      %v1163 = vld [vmem:[%s5 + $0x90] sm:$0xff]
      %v1164 = vld [vmem:[%s5 + $0x98] sm:$0xff]
      %v1165 = vld [vmem:[%s5 + $0xa0] sm:$0xff]
      %v1166 = vld [vmem:[%s5 + $0xa8] sm:$0xff]
      %v1167 = vld [vmem:[%s5 + $0xb0] sm:$0xff]
      %v1168 = vld [vmem:[%s5 + $0xb8] sm:$0xff]
      %v1169 = vld [vmem:[%s5 + $0xc0] sm:$0xff]
      %v1170 = vld [vmem:[%s5 + $0xc8] sm:$0xff]
      %v1171 = vld [vmem:[%s5 + $0xd0] sm:$0xff]
      %v1172 = vld [vmem:[%s5 + $0xd8] sm:$0xff]
      %v1173 = vld [vmem:[%s5 + $0xe0] sm:$0xff]
      %v1174 = vld [vmem:[%s5 + $0xe8] sm:$0xff]
      %v1175 = vld [vmem:[%s5 + $0xf0] sm:$0xff]
      %v1176 = vld [vmem:[%s5 + $0xf8] sm:$0xff]
      %v1177 = vld [vmem:[%s6] sm:$0x1]
      %v1179 = vlaneseq
      %v1180 = vshrl.u32 %v1179, 7
      %v1181 = vsub.s32 0, %v1180
      %v1182 = vrot.slane %v1177, %v1181
      %1184 = vmatprep.subr.mxu0 0.0
      %1185 = vmatpush1.msra.mxu0 %v1145
      %1186 = vmatprep.subr.mxu0 0.0
      %1187 = vmatpush1.msra.mxu0 %v1146
      %1188 = vmatprep.subr.mxu0 0.0
      %1189 = vmatpush1.msra.mxu0 %v1147
      %1190 = vmatprep.subr.mxu0 0.0
      %1191 = vmatpush1.msra.mxu0 %v1148
      %1192 = vmatprep.subr.mxu0 0.0
      %1193 = vmatpush1.msra.mxu0 %v1149
      %1194 = vmatprep.subr.mxu0 0.0
      %1195 = vmatpush1.msra.mxu0 %v1150
      %1196 = vmatprep.subr.mxu0 0.0
      %1197 = vmatpush1.msra.mxu0 %v1151
      %1198 = vmatprep.subr.mxu0 0.0
      %1199 = vmatpush1.msra.mxu0 %v1152
      %1200 = vmatprep.subr.mxu0 0.0
      %1201 = vmatpush1.msra.mxu0 %v1153
      %1202 = vmatprep.subr.mxu0 0.0
      %1203 = vmatpush1.msra.mxu0 %v1154
      %1204 = vmatprep.subr.mxu0 0.0
      %1205 = vmatpush1.msra.mxu0 %v1155
      %1206 = vmatprep.subr.mxu0 0.0
      %1207 = vmatpush1.msra.mxu0 %v1156
      %1208 = vmatprep.subr.mxu0 0.0
      %1209 = vmatpush1.msra.mxu0 %v1157
      %1210 = vmatprep.subr.mxu0 0.0
      %1211 = vmatpush1.msra.mxu0 %v1158
      %1212 = vmatprep.subr.mxu0 0.0
      %1213 = vmatpush1.msra.mxu0 %v1159
      %1214 = vmatprep.subr.mxu0 0.0
      %1215 = vmatpush1.msra.mxu0 %v1160
      %1216 = vmatprep.subr.mxu0 0.0
      %1217 = vmatpush1.msra.mxu0 %v1161
      %1218 = vmatprep.subr.mxu0 0.0
      %1219 = vmatpush1.msra.mxu0 %v1162
      %1220 = vmatprep.subr.mxu0 0.0
      %1221 = vmatpush1.msra.mxu0 %v1163
      %1222 = vmatprep.subr.mxu0 0.0
      %1223 = vmatpush1.msra.mxu0 %v1164
      %1224 = vmatprep.subr.mxu0 0.0
      %1225 = vmatpush1.msra.mxu0 %v1165
      %1226 = vmatprep.subr.mxu0 0.0
      %1227 = vmatpush1.msra.mxu0 %v1166
      %1228 = vmatprep.subr.mxu0 0.0
      %1229 = vmatpush1.msra.mxu0 %v1167
      %1230 = vmatprep.subr.mxu0 0.0
      %1231 = vmatpush1.msra.mxu0 %v1168
      %1232 = vmatprep.subr.mxu0 0.0
      %1233 = vmatpush1.msra.mxu0 %v1169
      %1234 = vmatprep.subr.mxu0 0.0
      %1235 = vmatpush1.msra.mxu0 %v1170
      %1236 = vmatprep.subr.mxu0 0.0
      %1237 = vmatpush1.msra.mxu0 %v1171
      %1238 = vmatprep.subr.mxu0 0.0
      %1239 = vmatpush1.msra.mxu0 %v1172
      %1240 = vmatprep.subr.mxu0 0.0
      %1241 = vmatpush1.msra.mxu0 %v1173
      %1242 = vmatprep.subr.mxu0 0.0
      %1243 = vmatpush1.msra.mxu0 %v1174
      %1244 = vmatprep.subr.mxu0 0.0
      %1245 = vmatpush1.msra.mxu0 %v1175
      %1246 = vmatprep.subr.mxu0 0.0
      %1247 = vmatpush1.msra.mxu0 %v1176
      %1248 = vmatprep.mubr.f32.mxu0 %v1082
      %1249 = vmatmul.mubr.f32.gmra.mrb[0].mxu0 %v1081
      %v1250 = vpop.f32.mrb[0].mxu0
      %v1251 = vadd.f32 %v1182, %v1250
      %v1252 = vpop.f32.mrb[0].mxu0
      %1253 = vmatprep.mubr.f32.mxu0 %v1084
      %1254 = vmatmul.mubr.f32.gmra.mrb[0].mxu0 %v1083
      %v1255 = vpop.f32.mrb[0].mxu0
      %v1256 = vadd.f32 %v1182, %v1255
      %v1257 = vpop.f32.mrb[0].mxu0
      %1258 = vmatprep.mubr.f32.mxu0 %v1086
      %1259 = vmatmul.mubr.f32.gmra.mrb[0].mxu0 %v1085
      %v1260 = vpop.f32.mrb[0].mxu0
      %v1261 = vadd.f32 %v1182, %v1260
      %v1262 = vpop.f32.mrb[0].mxu0
      %1263 = vmatprep.mubr.f32.mxu0 %v1088
      %1264 = vmatmul.mubr.f32.gmra.mrb[0].mxu0 %v1087
      %v1265 = vpop.f32.mrb[0].mxu0
      %v1266 = vadd.f32 %v1182, %v1265
      %v1267 = vpop.f32.mrb[0].mxu0
      %1268 = vmatprep.mubr.f32.mxu0 %v1090
      %1269 = vmatmul.mubr.f32.gmra.mrb[0].mxu0 %v1089
      %v1270 = vpop.f32.mrb[0].mxu0
      %v1271 = vadd.f32 %v1182, %v1270
      %v1272 = vpop.f32.mrb[0].mxu0
      %1273 = vmatprep.mubr.f32.mxu0 %v1092
      %1274 = vmatmul.mubr.f32.gmra.mrb[0].mxu0 %v1091
      %v1275 = vpop.f32.mrb[0].mxu0
      %v1276 = vadd.f32 %v1182, %v1275
      %v1277 = vpop.f32.mrb[0].mxu0
      %1278 = vmatprep.mubr.f32.mxu0 %v1094
      %1279 = vmatmul.mubr.f32.gmra.mrb[0].mxu0 %v1093
      %v1280 = vpop.f32.mrb[0].mxu0
      %v1281 = vadd.f32 %v1182, %v1280
      %v1282 = vpop.f32.mrb[0].mxu0
      %1283 = vmatprep.mubr.f32.mxu0 %v1096
      %1284 = vmatmul.mubr.f32.gmra.mrb[0].mxu0 %v1095
      %v1285 = vpop.f32.mrb[0].mxu0
      %v1286 = vadd.f32 %v1182, %v1285
      %v1287 = vpop.f32.mrb[0].mxu0
      %1288 = vmatprep.mubr.f32.mxu0 %v1098
      %1289 = vmatmul.mubr.f32.gmra.mrb[0].mxu0 %v1097
      %v1290 = vpop.f32.mrb[0].mxu0
      %v1291 = vadd.f32 %v1182, %v1290
      %v1292 = vpop.f32.mrb[0].mxu0
      %1293 = vmatprep.mubr.f32.mxu0 %v1100
      %1294 = vmatmul.mubr.f32.gmra.mrb[0].mxu0 %v1099
      %v1295 = vpop.f32.mrb[0].mxu0
      %v1296 = vadd.f32 %v1182, %v1295
      %v1297 = vpop.f32.mrb[0].mxu0
      %1298 = vmatprep.mubr.f32.mxu0 %v1102
      %1299 = vmatmul.mubr.f32.gmra.mrb[0].mxu0 %v1101
      %v1300 = vpop.f32.mrb[0].mxu0
      %v1301 = vadd.f32 %v1182, %v1300
      %v1302 = vpop.f32.mrb[0].mxu0
      %1303 = vmatprep.mubr.f32.mxu0 %v1104
      %1304 = vmatmul.mubr.f32.gmra.mrb[0].mxu0 %v1103
      %v1305 = vpop.f32.mrb[0].mxu0
      %v1306 = vadd.f32 %v1182, %v1305
      %v1307 = vpop.f32.mrb[0].mxu0
      %1308 = vmatprep.mubr.f32.mxu0 %v1106
      %1309 = vmatmul.mubr.f32.gmra.mrb[0].mxu0 %v1105
      %v1310 = vpop.f32.mrb[0].mxu0
      %v1311 = vadd.f32 %v1182, %v1310
      %v1312 = vpop.f32.mrb[0].mxu0
      %1313 = vmatprep.mubr.f32.mxu0 %v1108
      %1314 = vmatmul.mubr.f32.gmra.mrb[0].mxu0 %v1107
      %v1315 = vpop.f32.mrb[0].mxu0
      %v1316 = vadd.f32 %v1182, %v1315
      %v1317 = vpop.f32.mrb[0].mxu0
      %1318 = vmatprep.mubr.f32.mxu0 %v1110
      %1319 = vmatmul.mubr.f32.gmra.mrb[0].mxu0 %v1109
      %v1320 = vpop.f32.mrb[0].mxu0
      %v1321 = vadd.f32 %v1182, %v1320
      %v1322 = vpop.f32.mrb[0].mxu0
      %1323 = vmatprep.mubr.f32.mxu0 %v1112
      %1324 = vmatmul.mubr.f32.gmra.mrb[0].mxu0 %v1111
      %v1325 = vpop.f32.mrb[0].mxu0
      %v1326 = vadd.f32 %v1182, %v1325
      %v1327 = vpop.f32.mrb[0].mxu0
      %1328 = vmatprep.mubr.f32.mxu0 %v1114
      %1329 = vmatmul.mubr.f32.gmra.mrb[0].mxu0 %v1113
      %v1330 = vpop.f32.mrb[0].mxu0
      %v1331 = vadd.f32 %v1182, %v1330
      %v1332 = vpop.f32.mrb[0].mxu0
      %1333 = vmatprep.mubr.f32.mxu0 %v1116
      %1334 = vmatmul.mubr.f32.gmra.mrb[0].mxu0 %v1115
      %v1335 = vpop.f32.mrb[0].mxu0
      %v1336 = vadd.f32 %v1182, %v1335
      %v1337 = vpop.f32.mrb[0].mxu0
      %1338 = vmatprep.mubr.f32.mxu0 %v1118
      %1339 = vmatmul.mubr.f32.gmra.mrb[0].mxu0 %v1117
      %v1340 = vpop.f32.mrb[0].mxu0
      %v1341 = vadd.f32 %v1182, %v1340
      %v1342 = vpop.f32.mrb[0].mxu0
      %1343 = vmatprep.mubr.f32.mxu0 %v1120
      %1344 = vmatmul.mubr.f32.gmra.mrb[0].mxu0 %v1119
      %v1345 = vpop.f32.mrb[0].mxu0
      %v1346 = vadd.f32 %v1182, %v1345
      %v1347 = vpop.f32.mrb[0].mxu0
      %1348 = vmatprep.mubr.f32.mxu0 %v1122
      %1349 = vmatmul.mubr.f32.gmra.mrb[0].mxu0 %v1121
      %v1350 = vpop.f32.mrb[0].mxu0
      %v1351 = vadd.f32 %v1182, %v1350
      %v1352 = vpop.f32.mrb[0].mxu0
      %1353 = vmatprep.mubr.f32.mxu0 %v1124
      %1354 = vmatmul.mubr.f32.gmra.mrb[0].mxu0 %v1123
      %v1355 = vpop.f32.mrb[0].mxu0
      %v1356 = vadd.f32 %v1182, %v1355
      %v1357 = vpop.f32.mrb[0].mxu0
      %1358 = vmatprep.mubr.f32.mxu0 %v1126
      %1359 = vmatmul.mubr.f32.gmra.mrb[0].mxu0 %v1125
      %v1360 = vpop.f32.mrb[0].mxu0
      %v1361 = vadd.f32 %v1182, %v1360
      %v1362 = vpop.f32.mrb[0].mxu0
      %1363 = vmatprep.mubr.f32.mxu0 %v1128
      %1364 = vmatmul.mubr.f32.gmra.mrb[0].mxu0 %v1127
      %v1365 = vpop.f32.mrb[0].mxu0
      %v1366 = vadd.f32 %v1182, %v1365
      %v1367 = vpop.f32.mrb[0].mxu0
      %1368 = vmatprep.mubr.f32.mxu0 %v1130
      %1369 = vmatmul.mubr.f32.gmra.mrb[0].mxu0 %v1129
      %v1370 = vpop.f32.mrb[0].mxu0
      %v1371 = vadd.f32 %v1182, %v1370
      %v1372 = vpop.f32.mrb[0].mxu0
      %1373 = vmatprep.mubr.f32.mxu0 %v1132
      %1374 = vmatmul.mubr.f32.gmra.mrb[0].mxu0 %v1131
      %v1375 = vpop.f32.mrb[0].mxu0
      %v1376 = vadd.f32 %v1182, %v1375
      %v1377 = vpop.f32.mrb[0].mxu0
      %1378 = vmatprep.mubr.f32.mxu0 %v1134
      %1379 = vmatmul.mubr.f32.gmra.mrb[0].mxu0 %v1133
      %v1380 = vpop.f32.mrb[0].mxu0
      %v1381 = vadd.f32 %v1182, %v1380
      %v1382 = vpop.f32.mrb[0].mxu0
      %1383 = vmatprep.mubr.f32.mxu0 %v1136
      %1384 = vmatmul.mubr.f32.gmra.mrb[0].mxu0 %v1135
      %v1385 = vpop.f32.mrb[0].mxu0
      %v1386 = vadd.f32 %v1182, %v1385
      %v1387 = vpop.f32.mrb[0].mxu0
      %1388 = vmatprep.mubr.f32.mxu0 %v1138
      %1389 = vmatmul.mubr.f32.gmra.mrb[0].mxu0 %v1137
      %v1390 = vpop.f32.mrb[0].mxu0
      %v1391 = vadd.f32 %v1182, %v1390
      %v1392 = vpop.f32.mrb[0].mxu0
      %1393 = vmatprep.mubr.f32.mxu0 %v1140
      %1394 = vmatmul.mubr.f32.gmra.mrb[0].mxu0 %v1139
      %v1395 = vpop.f32.mrb[0].mxu0
      %v1396 = vadd.f32 %v1182, %v1395
      %v1397 = vpop.f32.mrb[0].mxu0
      %1398 = vmatprep.mubr.f32.mxu0 %v1142
      %1399 = vmatmul.mubr.f32.gmra.mrb[0].mxu0 %v1141
      %v1400 = vpop.f32.mrb[0].mxu0
      %v1401 = vadd.f32 %v1182, %v1400
      %v1402 = vpop.f32.mrb[0].mxu0
      %1403 = vmatprep.mubr.f32.mxu0 %v1144
      %1404 = vmatmul.mubr.f32.gmra.mrb[0].mxu0 %v1143
      %v1405 = vpop.f32.mrb[0].mxu0
      %v1406 = vadd.f32 %v1182, %v1405
      %v1407 = vpop.f32.mrb[0].mxu0
      %1408 = vdwg.mxu0
      %v1409 = vmul.f32 %v1251, 0.1
      %v1410 = vmul.f32 %v1256, 0.1
      %v1411 = vmul.f32 %v1261, 0.1
      %v1412 = vmul.f32 %v1266, 0.1
      %v1413 = vmul.f32 %v1271, 0.1
      %v1414 = vmul.f32 %v1276, 0.1
      %v1415 = vmul.f32 %v1281, 0.1
      %v1416 = vmul.f32 %v1286, 0.1
      %v1417 = vmul.f32 %v1291, 0.1
      %v1418 = vmul.f32 %v1296, 0.1
      %v1419 = vmul.f32 %v1301, 0.1
      %v1420 = vmul.f32 %v1306, 0.1
      %v1421 = vmul.f32 %v1311, 0.1
      %v1422 = vmul.f32 %v1316, 0.1
      %v1423 = vmul.f32 %v1321, 0.1
      %v1424 = vmul.f32 %v1326, 0.1
      %v1425 = vmul.f32 %v1331, 0.1
      %v1426 = vmul.f32 %v1336, 0.1
      %v1427 = vmul.f32 %v1341, 0.1
      %v1428 = vmul.f32 %v1346, 0.1
      %v1429 = vmul.f32 %v1351, 0.1
      %v1430 = vmul.f32 %v1356, 0.1
      %v1431 = vmul.f32 %v1361, 0.1
      %v1432 = vmul.f32 %v1366, 0.1
      %v1433 = vmul.f32 %v1371, 0.1
      %v1434 = vmul.f32 %v1376, 0.1
      %v1435 = vmul.f32 %v1381, 0.1
      %v1436 = vmul.f32 %v1386, 0.1
      %v1437 = vmul.f32 %v1391, 0.1
      %v1438 = vmul.f32 %v1396, 0.1
      %v1439 = vmul.f32 %v1401, 0.1
      %v1440 = vmul.f32 %v1406, 0.1
      %vm1441 = vcmask 31744
      %v1442 = vsel %vm1441, %v1409, -inf
      %1443 = vmax.xlane.f32.xlu0 %v1442
      %v1444 = vpop.xlane.xlu0 %1443
      %v1445 = vsel %vm1441, %v1410, -inf
      %1446 = vmax.xlane.f32.xlu0 %v1445
      %v1447 = vpop.xlane.xlu0 %1446
      %v1448 = vsel %vm1441, %v1411, -inf
      %1449 = vmax.xlane.f32.xlu0 %v1448
      %v1450 = vpop.xlane.xlu0 %1449
      %v1451 = vsel %vm1441, %v1412, -inf
      %1452 = vmax.xlane.f32.xlu0 %v1451
      %v1453 = vpop.xlane.xlu0 %1452
      %v1454 = vsel %vm1441, %v1413, -inf
      %1455 = vmax.xlane.f32.xlu0 %v1454
      %v1456 = vpop.xlane.xlu0 %1455
      %v1457 = vsel %vm1441, %v1414, -inf
      %1458 = vmax.xlane.f32.xlu0 %v1457
      %v1459 = vpop.xlane.xlu0 %1458
      %v1460 = vsel %vm1441, %v1415, -inf
      %1461 = vmax.xlane.f32.xlu0 %v1460
      %v1462 = vpop.xlane.xlu0 %1461
      %v1463 = vsel %vm1441, %v1416, -inf
      %1464 = vmax.xlane.f32.xlu0 %v1463
      %v1465 = vpop.xlane.xlu0 %1464
      %v1466 = vsel %vm1441, %v1417, -inf
      %1467 = vmax.xlane.f32.xlu0 %v1466
      %v1468 = vpop.xlane.xlu0 %1467
      %v1469 = vsel %vm1441, %v1418, -inf
      %1470 = vmax.xlane.f32.xlu0 %v1469
      %v1471 = vpop.xlane.xlu0 %1470
      %v1472 = vsel %vm1441, %v1419, -inf
      %1473 = vmax.xlane.f32.xlu0 %v1472
      %v1474 = vpop.xlane.xlu0 %1473
      %v1475 = vsel %vm1441, %v1420, -inf
      %1476 = vmax.xlane.f32.xlu0 %v1475
      %v1477 = vpop.xlane.xlu0 %1476
      %v1478 = vsel %vm1441, %v1421, -inf
      %1479 = vmax.xlane.f32.xlu0 %v1478
      %v1480 = vpop.xlane.xlu0 %1479
      %v1481 = vsel %vm1441, %v1422, -inf
      %1482 = vmax.xlane.f32.xlu0 %v1481
      %v1483 = vpop.xlane.xlu0 %1482
      %v1484 = vsel %vm1441, %v1423, -inf
      %1485 = vmax.xlane.f32.xlu0 %v1484
      %v1486 = vpop.xlane.xlu0 %1485
      %v1487 = vsel %vm1441, %v1424, -inf
      %1488 = vmax.xlane.f32.xlu0 %v1487
      %v1489 = vpop.xlane.xlu0 %1488
      %v1490 = vsel %vm1441, %v1425, -inf
      %1491 = vmax.xlane.f32.xlu0 %v1490
      %v1492 = vpop.xlane.xlu0 %1491
      %v1493 = vsel %vm1441, %v1426, -inf
      %1494 = vmax.xlane.f32.xlu0 %v1493
      %v1495 = vpop.xlane.xlu0 %1494
      %v1496 = vsel %vm1441, %v1427, -inf
      %1497 = vmax.xlane.f32.xlu0 %v1496
      %v1498 = vpop.xlane.xlu0 %1497
      %v1499 = vsel %vm1441, %v1428, -inf
      %1500 = vmax.xlane.f32.xlu0 %v1499
      %v1501 = vpop.xlane.xlu0 %1500
      %v1502 = vsel %vm1441, %v1429, -inf
      %1503 = vmax.xlane.f32.xlu0 %v1502
      %v1504 = vpop.xlane.xlu0 %1503
      %v1505 = vsel %vm1441, %v1430, -inf
      %1506 = vmax.xlane.f32.xlu0 %v1505
      %v1507 = vpop.xlane.xlu0 %1506
      %v1508 = vsel %vm1441, %v1431, -inf
      %1509 = vmax.xlane.f32.xlu0 %v1508
      %v1510 = vpop.xlane.xlu0 %1509
      %v1511 = vsel %vm1441, %v1432, -inf
      %1512 = vmax.xlane.f32.xlu0 %v1511
      %v1513 = vpop.xlane.xlu0 %1512
      %v1514 = vsel %vm1441, %v1433, -inf
      %1515 = vmax.xlane.f32.xlu0 %v1514
      %v1516 = vpop.xlane.xlu0 %1515
      %v1517 = vsel %vm1441, %v1434, -inf
      %1518 = vmax.xlane.f32.xlu0 %v1517
      %v1519 = vpop.xlane.xlu0 %1518
      %v1520 = vsel %vm1441, %v1435, -inf
      %1521 = vmax.xlane.f32.xlu0 %v1520
      %v1522 = vpop.xlane.xlu0 %1521
      %v1523 = vsel %vm1441, %v1436, -inf
      %1524 = vmax.xlane.f32.xlu0 %v1523
      %v1525 = vpop.xlane.xlu0 %1524
      %v1526 = vsel %vm1441, %v1437, -inf
      %1527 = vmax.xlane.f32.xlu0 %v1526
      %v1528 = vpop.xlane.xlu0 %1527
      %v1529 = vsel %vm1441, %v1438, -inf
      %1530 = vmax.xlane.f32.xlu0 %v1529
      %v1531 = vpop.xlane.xlu0 %1530
      %v1532 = vsel %vm1441, %v1439, -inf
      %1533 = vmax.xlane.f32.xlu0 %v1532
      %v1534 = vpop.xlane.xlu0 %1533
      %v1535 = vsel %vm1441, %v1440, -inf
      %1536 = vmax.xlane.f32.xlu0 %v1535
      %v1537 = vpop.xlane.xlu0 %1536
      %v1538 = vsub.f32 %v1409, %v1444
      %v1539 = vsub.f32 %v1410, %v1447
      %v1540 = vsub.f32 %v1411, %v1450
      %v1541 = vsub.f32 %v1412, %v1453
      %v1542 = vsub.f32 %v1413, %v1456
      %v1543 = vsub.f32 %v1414, %v1459
      %v1544 = vsub.f32 %v1415, %v1462
      %v1545 = vsub.f32 %v1416, %v1465
      %v1546 = vsub.f32 %v1417, %v1468
      %v1547 = vsub.f32 %v1418, %v1471
      %v1548 = vsub.f32 %v1419, %v1474
      %v1549 = vsub.f32 %v1420, %v1477
      %v1550 = vsub.f32 %v1421, %v1480
      %v1551 = vsub.f32 %v1422, %v1483
      %v1552 = vsub.f32 %v1423, %v1486
      %v1553 = vsub.f32 %v1424, %v1489
      %v1554 = vsub.f32 %v1425, %v1492
      %v1555 = vsub.f32 %v1426, %v1495
      %v1556 = vsub.f32 %v1427, %v1498
      %v1557 = vsub.f32 %v1428, %v1501
      %v1558 = vsub.f32 %v1429, %v1504
      %v1559 = vsub.f32 %v1430, %v1507
      %v1560 = vsub.f32 %v1431, %v1510
      %v1561 = vsub.f32 %v1432, %v1513
      %v1562 = vsub.f32 %v1433, %v1516
      %v1563 = vsub.f32 %v1434, %v1519
      %v1564 = vsub.f32 %v1435, %v1522
      %v1565 = vsub.f32 %v1436, %v1525
      %v1566 = vsub.f32 %v1437, %v1528
      %v1567 = vsub.f32 %v1438, %v1531
      %v1568 = vsub.f32 %v1439, %v1534
      %v1569 = vsub.f32 %v1440, %v1537
      %v1570 = vmul.f32 %v1538, 1.442695
      %v1571 = vpow.pop %v1570
      %v1572 = vmul.f32 %v1539, 1.442695
      %v1573 = vpow.pop %v1572
      %v1574 = vmul.f32 %v1540, 1.442695
      %v1575 = vpow.pop %v1574
      %v1576 = vmul.f32 %v1541, 1.442695
      %v1577 = vpow.pop %v1576
      %v1578 = vmul.f32 %v1542, 1.442695
      %v1579 = vpow.pop %v1578
      %v1580 = vmul.f32 %v1543, 1.442695
      %v1581 = vpow.pop %v1580
      %v1582 = vmul.f32 %v1544, 1.442695
      %v1583 = vpow.pop %v1582
      %v1584 = vmul.f32 %v1545, 1.442695
      %v1585 = vpow.pop %v1584
      %v1586 = vmul.f32 %v1546, 1.442695
      %v1587 = vpow.pop %v1586
      %v1588 = vmul.f32 %v1547, 1.442695
      %v1589 = vpow.pop %v1588
      %v1590 = vmul.f32 %v1548, 1.442695
      %v1591 = vpow.pop %v1590
      %v1592 = vmul.f32 %v1549, 1.442695
      %v1593 = vpow.pop %v1592
      %v1594 = vmul.f32 %v1550, 1.442695
      %v1595 = vpow.pop %v1594
      %v1596 = vmul.f32 %v1551, 1.442695
      %v1597 = vpow.pop %v1596
      %v1598 = vmul.f32 %v1552, 1.442695
      %v1599 = vpow.pop %v1598
      %v1600 = vmul.f32 %v1553, 1.442695
      %v1601 = vpow.pop %v1600
      %v1602 = vmul.f32 %v1554, 1.442695
      %v1603 = vpow.pop %v1602
      %v1604 = vmul.f32 %v1555, 1.442695
      %v1605 = vpow.pop %v1604
      %v1606 = vmul.f32 %v1556, 1.442695
      %v1607 = vpow.pop %v1606
      %v1608 = vmul.f32 %v1557, 1.442695
      %v1609 = vpow.pop %v1608
      %v1610 = vmul.f32 %v1558, 1.442695
      %v1611 = vpow.pop %v1610
      %v1612 = vmul.f32 %v1559, 1.442695
      %v1613 = vpow.pop %v1612
      %v1614 = vmul.f32 %v1560, 1.442695
      %v1615 = vpow.pop %v1614
      %v1616 = vmul.f32 %v1561, 1.442695
      %v1617 = vpow.pop %v1616
      %v1618 = vmul.f32 %v1562, 1.442695
      %v1619 = vpow.pop %v1618
      %v1620 = vmul.f32 %v1563, 1.442695
      %v1621 = vpow.pop %v1620
      %v1622 = vmul.f32 %v1564, 1.442695
      %v1623 = vpow.pop %v1622
      %v1624 = vmul.f32 %v1565, 1.442695
      %v1625 = vpow.pop %v1624
      %v1626 = vmul.f32 %v1566, 1.442695
      %v1627 = vpow.pop %v1626
      %v1628 = vmul.f32 %v1567, 1.442695
      %v1629 = vpow.pop %v1628
      %v1630 = vmul.f32 %v1568, 1.442695
      %v1631 = vpow.pop %v1630
      %v1632 = vmul.f32 %v1569, 1.442695
      %v1633 = vpow.pop %v1632
      %v1634 = vsel %vm1441, %v1571, 0.0
      %1635 = vadd.xlane.f32.xlu0 %v1634
      %v1636 = vpop.xlane.xlu0 %1635
      %v1637 = vsel %vm1441, %v1573, 0.0
      %1638 = vadd.xlane.f32.xlu0 %v1637
      %v1639 = vpop.xlane.xlu0 %1638
      %v1640 = vsel %vm1441, %v1575, 0.0
      %1641 = vadd.xlane.f32.xlu0 %v1640
      %v1642 = vpop.xlane.xlu0 %1641
      %v1643 = vsel %vm1441, %v1577, 0.0
      %1644 = vadd.xlane.f32.xlu0 %v1643
      %v1645 = vpop.xlane.xlu0 %1644
      %v1646 = vsel %vm1441, %v1579, 0.0
      %1647 = vadd.xlane.f32.xlu0 %v1646
      %v1648 = vpop.xlane.xlu0 %1647
      %v1649 = vsel %vm1441, %v1581, 0.0
      %1650 = vadd.xlane.f32.xlu0 %v1649
      %v1651 = vpop.xlane.xlu0 %1650
      %v1652 = vsel %vm1441, %v1583, 0.0
      %1653 = vadd.xlane.f32.xlu0 %v1652
      %v1654 = vpop.xlane.xlu0 %1653
      %v1655 = vsel %vm1441, %v1585, 0.0
      %1656 = vadd.xlane.f32.xlu0 %v1655
      %v1657 = vpop.xlane.xlu0 %1656
      %v1658 = vsel %vm1441, %v1587, 0.0
      %1659 = vadd.xlane.f32.xlu0 %v1658
      %v1660 = vpop.xlane.xlu0 %1659
      %v1661 = vsel %vm1441, %v1589, 0.0
      %1662 = vadd.xlane.f32.xlu0 %v1661
      %v1663 = vpop.xlane.xlu0 %1662
      %v1664 = vsel %vm1441, %v1591, 0.0
      %1665 = vadd.xlane.f32.xlu0 %v1664
      %v1666 = vpop.xlane.xlu0 %1665
      %v1667 = vsel %vm1441, %v1593, 0.0
      %1668 = vadd.xlane.f32.xlu0 %v1667
      %v1669 = vpop.xlane.xlu0 %1668
      %v1670 = vsel %vm1441, %v1595, 0.0
      %1671 = vadd.xlane.f32.xlu0 %v1670
      %v1672 = vpop.xlane.xlu0 %1671
      %v1673 = vsel %vm1441, %v1597, 0.0
      %1674 = vadd.xlane.f32.xlu0 %v1673
      %v1675 = vpop.xlane.xlu0 %1674
      %v1676 = vsel %vm1441, %v1599, 0.0
      %1677 = vadd.xlane.f32.xlu0 %v1676
      %v1678 = vpop.xlane.xlu0 %1677
      %v1679 = vsel %vm1441, %v1601, 0.0
      %1680 = vadd.xlane.f32.xlu0 %v1679
      %v1681 = vpop.xlane.xlu0 %1680
      %v1682 = vsel %vm1441, %v1603, 0.0
      %1683 = vadd.xlane.f32.xlu0 %v1682
      %v1684 = vpop.xlane.xlu0 %1683
      %v1685 = vsel %vm1441, %v1605, 0.0
      %1686 = vadd.xlane.f32.xlu0 %v1685
      %v1687 = vpop.xlane.xlu0 %1686
      %v1688 = vsel %vm1441, %v1607, 0.0
      %1689 = vadd.xlane.f32.xlu0 %v1688
      %v1690 = vpop.xlane.xlu0 %1689
      %v1691 = vsel %vm1441, %v1609, 0.0
      %1692 = vadd.xlane.f32.xlu0 %v1691
      %v1693 = vpop.xlane.xlu0 %1692
      %v1694 = vsel %vm1441, %v1611, 0.0
      %1695 = vadd.xlane.f32.xlu0 %v1694
      %v1696 = vpop.xlane.xlu0 %1695
      %v1697 = vsel %vm1441, %v1613, 0.0
      %1698 = vadd.xlane.f32.xlu0 %v1697
      %v1699 = vpop.xlane.xlu0 %1698
      %v1700 = vsel %vm1441, %v1615, 0.0
      %1701 = vadd.xlane.f32.xlu0 %v1700
      %v1702 = vpop.xlane.xlu0 %1701
      %v1703 = vsel %vm1441, %v1617, 0.0
      %1704 = vadd.xlane.f32.xlu0 %v1703
      %v1705 = vpop.xlane.xlu0 %1704
      %v1706 = vsel %vm1441, %v1619, 0.0
      %1707 = vadd.xlane.f32.xlu0 %v1706
      %v1708 = vpop.xlane.xlu0 %1707
      %v1709 = vsel %vm1441, %v1621, 0.0
      %1710 = vadd.xlane.f32.xlu0 %v1709
      %v1711 = vpop.xlane.xlu0 %1710
      %v1712 = vsel %vm1441, %v1623, 0.0
      %1713 = vadd.xlane.f32.xlu0 %v1712
      %v1714 = vpop.xlane.xlu0 %1713
      %v1715 = vsel %vm1441, %v1625, 0.0
      %1716 = vadd.xlane.f32.xlu0 %v1715
      %v1717 = vpop.xlane.xlu0 %1716
      %v1718 = vsel %vm1441, %v1627, 0.0
      %1719 = vadd.xlane.f32.xlu0 %v1718
      %v1720 = vpop.xlane.xlu0 %1719
      %v1721 = vsel %vm1441, %v1629, 0.0
      %1722 = vadd.xlane.f32.xlu0 %v1721
      %v1723 = vpop.xlane.xlu0 %1722
      %v1724 = vsel %vm1441, %v1631, 0.0
      %1725 = vadd.xlane.f32.xlu0 %v1724
      %v1726 = vpop.xlane.xlu0 %1725
      %v1727 = vsel %vm1441, %v1633, 0.0
      %1728 = vadd.xlane.f32.xlu0 %v1727
      %v1729 = vpop.xlane.xlu0 %1728
      %v1730 = vrcp.pop %v1636
      %v1731 = vmul.f32 %v1571, %v1730
      %v1732 = vrcp.pop %v1639
      %v1733 = vmul.f32 %v1573, %v1732
      %v1734 = vrcp.pop %v1642
      %v1735 = vmul.f32 %v1575, %v1734
      %v1736 = vrcp.pop %v1645
      %v1737 = vmul.f32 %v1577, %v1736
      %v1738 = vrcp.pop %v1648
      %v1739 = vmul.f32 %v1579, %v1738
      %v1740 = vrcp.pop %v1651
      %v1741 = vmul.f32 %v1581, %v1740
      %v1742 = vrcp.pop %v1654
      %v1743 = vmul.f32 %v1583, %v1742
      %v1744 = vrcp.pop %v1657
      %v1745 = vmul.f32 %v1585, %v1744
      %v1746 = vrcp.pop %v1660
      %v1747 = vmul.f32 %v1587, %v1746
      %v1748 = vrcp.pop %v1663
      %v1749 = vmul.f32 %v1589, %v1748
      %v1750 = vrcp.pop %v1666
      %v1751 = vmul.f32 %v1591, %v1750
      %v1752 = vrcp.pop %v1669
      %v1753 = vmul.f32 %v1593, %v1752
      %v1754 = vrcp.pop %v1672
      %v1755 = vmul.f32 %v1595, %v1754
      %v1756 = vrcp.pop %v1675
      %v1757 = vmul.f32 %v1597, %v1756
      %v1758 = vrcp.pop %v1678
      %v1759 = vmul.f32 %v1599, %v1758
      %v1760 = vrcp.pop %v1681
      %v1761 = vmul.f32 %v1601, %v1760
      %v1762 = vrcp.pop %v1684
      %v1763 = vmul.f32 %v1603, %v1762
      %v1764 = vrcp.pop %v1687
      %v1765 = vmul.f32 %v1605, %v1764
      %v1766 = vrcp.pop %v1690
      %v1767 = vmul.f32 %v1607, %v1766
      %v1768 = vrcp.pop %v1693
      %v1769 = vmul.f32 %v1609, %v1768
      %v1770 = vrcp.pop %v1696
      %v1771 = vmul.f32 %v1611, %v1770
      %v1772 = vrcp.pop %v1699
      %v1773 = vmul.f32 %v1613, %v1772
      %v1774 = vrcp.pop %v1702
      %v1775 = vmul.f32 %v1615, %v1774
      %v1776 = vrcp.pop %v1705
      %v1777 = vmul.f32 %v1617, %v1776
      %v1778 = vrcp.pop %v1708
      %v1779 = vmul.f32 %v1619, %v1778
      %v1780 = vrcp.pop %v1711
      %v1781 = vmul.f32 %v1621, %v1780
      %v1782 = vrcp.pop %v1714
      %v1783 = vmul.f32 %v1623, %v1782
      %v1784 = vrcp.pop %v1717
      %v1785 = vmul.f32 %v1625, %v1784
      %v1786 = vrcp.pop %v1720
      %v1787 = vmul.f32 %v1627, %v1786
      %v1788 = vrcp.pop %v1723
      %v1789 = vmul.f32 %v1629, %v1788
      %v1790 = vrcp.pop %v1726
      %v1791 = vmul.f32 %v1631, %v1790
      %v1792 = vrcp.pop %v1729
      %v1793 = vmul.f32 %v1633, %v1792
      %1794 = vst.msk [vmem:[%s280] sm:$0xff] %vm1441, %v1731
      %1795 = vst.msk [vmem:[%s280 + $0x8] sm:$0xff] %vm1441, %v1733
      %1796 = vst.msk [vmem:[%s280 + $0x10] sm:$0xff] %vm1441, %v1735
      %1797 = vst.msk [vmem:[%s280 + $0x18] sm:$0xff] %vm1441, %v1737
      %1798 = vst.msk [vmem:[%s280 + $0x20] sm:$0xff] %vm1441, %v1739
      %1799 = vst.msk [vmem:[%s280 + $0x28] sm:$0xff] %vm1441, %v1741
      %1800 = vst.msk [vmem:[%s280 + $0x30] sm:$0xff] %vm1441, %v1743
      %1801 = vst.msk [vmem:[%s280 + $0x38] sm:$0xff] %vm1441, %v1745
      %1802 = vst.msk [vmem:[%s280 + $0x40] sm:$0xff] %vm1441, %v1747
      %1803 = vst.msk [vmem:[%s280 + $0x48] sm:$0xff] %vm1441, %v1749
      %1804 = vst.msk [vmem:[%s280 + $0x50] sm:$0xff] %vm1441, %v1751
      %1805 = vst.msk [vmem:[%s280 + $0x58] sm:$0xff] %vm1441, %v1753
      %1806 = vst.msk [vmem:[%s280 + $0x60] sm:$0xff] %vm1441, %v1755
      %1807 = vst.msk [vmem:[%s280 + $0x68] sm:$0xff] %vm1441, %v1757
      %1808 = vst.msk [vmem:[%s280 + $0x70] sm:$0xff] %vm1441, %v1759
      %1809 = vst.msk [vmem:[%s280 + $0x78] sm:$0xff] %vm1441, %v1761
      %1810 = vst.msk [vmem:[%s280 + $0x80] sm:$0xff] %vm1441, %v1763
      %1811 = vst.msk [vmem:[%s280 + $0x88] sm:$0xff] %vm1441, %v1765
      %1812 = vst.msk [vmem:[%s280 + $0x90] sm:$0xff] %vm1441, %v1767
      %1813 = vst.msk [vmem:[%s280 + $0x98] sm:$0xff] %vm1441, %v1769
      %1814 = vst.msk [vmem:[%s280 + $0xa0] sm:$0xff] %vm1441, %v1771
      %1815 = vst.msk [vmem:[%s280 + $0xa8] sm:$0xff] %vm1441, %v1773
      %1816 = vst.msk [vmem:[%s280 + $0xb0] sm:$0xff] %vm1441, %v1775
      %1817 = vst.msk [vmem:[%s280 + $0xb8] sm:$0xff] %vm1441, %v1777
      %1818 = vst.msk [vmem:[%s280 + $0xc0] sm:$0xff] %vm1441, %v1779
      %1819 = vst.msk [vmem:[%s280 + $0xc8] sm:$0xff] %vm1441, %v1781
      %1820 = vst.msk [vmem:[%s280 + $0xd0] sm:$0xff] %vm1441, %v1783
      %1821 = vst.msk [vmem:[%s280 + $0xd8] sm:$0xff] %vm1441, %v1785
      %1822 = vst.msk [vmem:[%s280 + $0xe0] sm:$0xff] %vm1441, %v1787
      %1823 = vst.msk [vmem:[%s280 + $0xe8] sm:$0xff] %vm1441, %v1789
      %1824 = vst.msk [vmem:[%s280 + $0xf0] sm:$0xff] %vm1441, %v1791
      %1825 = vst.msk [vmem:[%s280 + $0xf8] sm:$0xff] %vm1441, %v1793
      %s1826 = smul.u32 32, %s18
      %p1827 = scmp.lt.s32.totalorder %s1826, 63
      %s1828 = scalar_select %p1827, %s1826, 63
      %s1829 = smul.addr %s1828, 8
      %s1830 = scalar_lea.vmem %s7, %s1829
      // Predicated region
      $region49: #{tpu_custom_call.1} parent=47 // pred_check
        %p1831 = pneg %p188
      $region50: #{tpu_custom_call.1} parent=47 // pred_check_branch
        %1833 = sbr.rel (%p1831) target = $region52
      $region51: #{tpu_custom_call.1} parent=47 // pred_region
        %s1834 = smul.u32 32, %s18
      $region52: #{tpu_custom_call.1} parent=47 // pred_fallthru
        _
    $region48: #{tpu_custom_call.1} parent=5 // pred_fallthru
      _
    %p1835 = scmp.le.s32.totalorder 2, %s13
    // Predicated region
    $region53: #{tpu_custom_call.1} parent=5 // pred_check
      %p1836 = pneg %p1835
    $region54: #{tpu_custom_call.1} parent=5 // pred_check_branch
      %1838 = sbr.rel (%p1836) target = $region56
    $region55: #{tpu_custom_call.1} parent=5 // pred_region
      %s1839 = ssub.s32 %s13, 2
      // Predicated region
      $region57: #{tpu_custom_call.1} parent=55 // pred_check
        %p1840 = pneg %p194
      $region58: #{tpu_custom_call.1} parent=55 // pred_check_branch
        %1842 = sbr.rel (%p1840) target = $region60
      $region59: #{tpu_custom_call.1} parent=55 // pred_region
        %s1843 = smul.u32 32, %s19
        %p1844 = scmp.lt.s32.totalorder %s1843, 63
        %s1845 = scalar_select %p1844, %s1843, 63
        %s1846 = smul.addr %s1845, 8
        %s1847 = scalar_lea.vmem %s7, %s1846
      $region60: #{tpu_custom_call.1} parent=55 // pred_fallthru
        _
    $region56: #{tpu_custom_call.1} parent=5 // pred_fallthru
      _
  $region6: #{tpu_custom_call.1} parent=0 // loop_footer
    %s17 = sadd.s32 1, %s13
  $region7: #{tpu_custom_call.1} parent=0 // loop_footer_branch
    %12 = sbr.rel target = $region3
  $region8: #{tpu_custom_call.1} parent=0 // loop_exit
    _

</llo_original>
